<compile_context>
chip_gen: v5e
topology: v5e:2x2
jax: 0.10.0
libtpu: 0.0.40
codegen_flags: <defaults>
</compile_context>

<pallas_src>
import functools

import jax
import jax.numpy as jnp
from jax import lax
from jax.experimental import pallas as pl
from jax.experimental.pallas import tpu as pltpu

EPS = 1e-5                      # PyTorch nn.LayerNorm default eps
_INV_SQRT2 = 0.7071067811865476  # 1/sqrt(2) for exact-erf GELU


def _layernorm(x, w, b):
    mu = jnp.mean(x, axis=-1, keepdims=True)
    xc = x - mu
    var = jnp.mean(xc * xc, axis=-1, keepdims=True)
    return xc * lax.rsqrt(var + EPS) * w + b


def _gelu_exact(x):
    # PyTorch nn.GELU() default = exact erf formulation
    return 0.5 * x * (1.0 + lax.erf(x * _INV_SQRT2))


def block_kernel(x_ref, ln1w_ref, ln1b_ref, wqkv_ref, wproj_ref, bproj_ref,
                 ln2w_ref, ln2b_ref, w1_ref, b1_ref, w2_ref, b2_ref,
                 out_ref, *, num_head):
    x = x_ref[...]                                   # (N, C) f32  (batch squeezed)
    N, C = x.shape
    D = C // num_head
    scale = float(D) ** -0.5

    # ---------------- attention branch ----------------
    h = _layernorm(x, ln1w_ref[0], ln1b_ref[0])                       # f32 (N, C)
    qkv = jnp.dot(h.astype(jnp.bfloat16), wqkv_ref[...],
                  preferred_element_type=jnp.float32)                 # (N, 3C) f32

    head_outs = []
    for hd in range(num_head):                       # lane-contiguous head slices
        lo = hd * D
        # fold 1/sqrt(D) into q (O(N*D) per head) instead of scaling s (O(N^2))
        q_h = (qkv[:, lo:lo + D] * scale).astype(jnp.bfloat16)         # (N, D)
        k_h = qkv[:, C + lo:C + lo + D].astype(jnp.bfloat16)           # (N, D)
        v_h = qkv[:, 2 * C + lo:2 * C + lo + D].astype(jnp.bfloat16)   # (N, D)

        s = jnp.dot(q_h, k_h.T, preferred_element_type=jnp.float32)    # (N, N) f32
        s_max = jnp.max(s, axis=-1, keepdims=True)
        p = jnp.exp(s - s_max)                                         # f32 (N, N)
        denom = jnp.sum(p, axis=-1, keepdims=True)                     # (N, 1)
        o_h = jnp.dot(p.astype(jnp.bfloat16), v_h,
                      preferred_element_type=jnp.float32)              # (N, D) f32
        # deferred softmax normalization: (p/denom)@v == (p@v) * (1/denom)
        head_outs.append(o_h * pl.reciprocal(denom, approx=True))
    # concatenate heads back to (N, C) so the output projection runs with a full
    # C-wide contraction (better MXU utilization than per-head (N,D)@(D,C) sums)
    o = jnp.concatenate(head_outs, axis=-1)                            # (N, C) f32

    attn_out = jnp.dot(o.astype(jnp.bfloat16), wproj_ref[...],
                       preferred_element_type=jnp.float32) + bproj_ref[0]
    x1 = x + attn_out                                                  # residual 1

    # ---------------- MLP branch ----------------
    h2 = _layernorm(x1, ln2w_ref[0], ln2b_ref[0])
    z = jnp.dot(h2.astype(jnp.bfloat16), w1_ref[...],
                preferred_element_type=jnp.float32) + b1_ref[0]
    z = _gelu_exact(z)                                                 # f32 VPU/EUP
    mlp_out = jnp.dot(z.astype(jnp.bfloat16), w2_ref[...],
                      preferred_element_type=jnp.float32) + b2_ref[0]

    out_ref[...] = (x1 + mlp_out).astype(out_ref.dtype)                # residual 2


def _weight_spec(shape, single_buffer):
    idx = lambda b: (0,) * len(shape)
    if single_buffer:
        # Constant block index across the grid -> one VMEM buffer suffices
        # (halves resident weight footprint vs. default double-buffering).
        return pl.BlockSpec(shape, idx, pipeline_mode=pl.Buffered(1))
    return pl.BlockSpec(shape, idx)


def _vit_block_call(x, params, num_head, *, single_buffer_weights):
    B, N, C = x.shape
    H = params["w1"].shape[1]
    assert C % num_head == 0, "embed_dim must be divisible by num_head"

    wspec = functools.partial(_weight_spec, single_buffer=single_buffer_weights)
    in_specs = [
        pl.BlockSpec((None, N, C), lambda b: (b, 0, 0)),   # x (batch dim squeezed)
        wspec((1, C)), wspec((1, C)),                      # ln1 w, b
        wspec((C, 3 * C)),                                 # qkv weight (in, out)
        wspec((C, C)), wspec((1, C)),                      # proj weight, bias
        wspec((1, C)), wspec((1, C)),                      # ln2 w, b
        wspec((C, H)), wspec((1, H)),                      # mlp fc1 w, b
        wspec((H, C)), wspec((1, C)),                      # mlp fc2 w, b
    ]

    kernel = functools.partial(block_kernel, num_head=num_head)
    return pl.pallas_call(
        kernel,
        out_shape=jax.ShapeDtypeStruct((B, N, C), x.dtype),
        grid_spec=pltpu.PrefetchScalarGridSpec(
            num_scalar_prefetch=0,
            grid=(B,),
            in_specs=in_specs,
            out_specs=pl.BlockSpec((None, N, C), lambda b: (b, 0, 0)),
        ),
        compiler_params=pltpu.CompilerParams(
            dimension_semantics=("parallel",),   # batch steps independent (megacore)
            vmem_limit_bytes=56 * 1024 * 1024,   # explicit budget, < v7x 64 MiB ceiling
        ),
    )(x,
      params["ln1_w"], params["ln1_b"],
      params["wqkv"],
      params["wproj"], params["bproj"],
      params["ln2_w"], params["ln2_b"],
      params["w1"], params["b1"],
      params["w2"], params["b2"])


def vit_block(x, params, num_head):
    try:
        out = _vit_block_call(x, params, num_head, single_buffer_weights=True)
        return jax.block_until_ready(out)
    except Exception:
        # This JAX build rejects pipeline_mode=pl.Buffered(1); fall back to the
        # default double-buffered weight pipeline (numerically identical).
        out = _vit_block_call(x, params, num_head, single_buffer_weights=False)
        return jax.block_until_ready(out)


def make_params(key, embed_dim, mlp_ratio=4):
    hidden = int(embed_dim * mlp_ratio)
    ks = jax.random.split(key, 6)
    std = 0.02
    # Matmul weights stored as bf16 (MXU-native, halves DMA + VMEM bytes);
    # LayerNorm params and biases stay f32 (added on the VPU in f32).
    return {
        "ln1_w": jnp.ones((1, embed_dim), jnp.float32),
        "ln1_b": jnp.zeros((1, embed_dim), jnp.float32),
        # stored as (in, out) so the kernel does x @ W  (PyTorch: x @ W.T)
        "wqkv": (std * jax.random.normal(ks[0], (embed_dim, 3 * embed_dim),
                                         jnp.float32)).astype(jnp.bfloat16),
        "wproj": (std * jax.random.normal(ks[1], (embed_dim, embed_dim),
                                          jnp.float32)).astype(jnp.bfloat16),
        "bproj": std * jax.random.normal(ks[2], (1, embed_dim), jnp.float32),
        "ln2_w": jnp.ones((1, embed_dim), jnp.float32),
        "ln2_b": jnp.zeros((1, embed_dim), jnp.float32),
        "w1": (std * jax.random.normal(ks[3], (embed_dim, hidden),
                                       jnp.float32)).astype(jnp.bfloat16),
        "b1": std * jax.random.normal(ks[4], (1, hidden), jnp.float32),
        "w2": (std * jax.random.normal(ks[5], (hidden, embed_dim),
                                       jnp.float32)).astype(jnp.bfloat16),
        "b2": jnp.zeros((1, embed_dim), jnp.float32),
    }


def reference_block(x, p, num_head):
    # pure-JAX f32 reference (mirrors the PyTorch forward, eval mode),
    # using the same (bf16-valued) weights upcast to f32.
    B, N, C = x.shape
    D = C // num_head
    wqkv = p["wqkv"].astype(jnp.float32)
    wproj = p["wproj"].astype(jnp.float32)
    w1 = p["w1"].astype(jnp.float32)
    w2 = p["w2"].astype(jnp.float32)
    h = _layernorm(x, p["ln1_w"][0], p["ln1_b"][0])
    qkv = h @ wqkv
    q, k, v = (qkv[..., i * C:(i + 1) * C].reshape(B, N, num_head, D)
               for i in range(3))
    s = jnp.einsum('bnhd,bmhd->bhnm', q, k) * (D ** -0.5)
    a = jax.nn.softmax(s, axis=-1)
    o = jnp.einsum('bhnm,bmhd->bnhd', a, v).reshape(B, N, C)
    x1 = x + o @ wproj + p["bproj"][0]
    h2 = _layernorm(x1, p["ln2_w"][0], p["ln2_b"][0])
    z = _gelu_exact(h2 @ w1 + p["b1"][0])
    return x1 + z @ w2 + p["b2"][0]


if __name__ == "__main__":
    B, N, C, NUM_HEAD = 2, 8, 32, 4
    key = jax.random.PRNGKey(0)
    kx, kp = jax.random.split(key)
    x = jax.random.normal(kx, (B, N, C), jnp.float32)
    params = make_params(kp, C)

    out = vit_block(x, params, NUM_HEAD)
    out = jax.block_until_ready(out)

    ref = reference_block(x, params, NUM_HEAD)
    assert out.shape == (B, N, C)
    err = jnp.max(jnp.abs(out - ref))
    # bf16 matmul operands + approx reciprocal => small mismatch vs f32 reference
    assert err < 5e-2, f"mismatch vs JAX reference: {err}"

    print("KERNEL_OK")
</pallas_src>

<mosaic_0001>
module attributes {stable_mosaic.version = 11 : i64} {
  func.func @block_kernel(%arg0: i32, %arg1: memref<1x8x32xf32, #tpu.memory_space<vmem>>, %arg2: memref<1x32xf32, #tpu.memory_space<vmem>>, %arg3: memref<1x32xf32, #tpu.memory_space<vmem>>, %arg4: memref<32x96xbf16, #tpu.memory_space<vmem>>, %arg5: memref<32x32xbf16, #tpu.memory_space<vmem>>, %arg6: memref<1x32xf32, #tpu.memory_space<vmem>>, %arg7: memref<1x32xf32, #tpu.memory_space<vmem>>, %arg8: memref<1x32xf32, #tpu.memory_space<vmem>>, %arg9: memref<32x128xbf16, #tpu.memory_space<vmem>>, %arg10: memref<1x128xf32, #tpu.memory_space<vmem>>, %arg11: memref<128x32xbf16, #tpu.memory_space<vmem>>, %arg12: memref<1x32xf32, #tpu.memory_space<vmem>>, %arg13: memref<1x8x32xf32, #tpu.memory_space<vmem>>) attributes {dimension_semantics = [#tpu.dimension_semantics<parallel>], iteration_bounds = array<i64: 2>, scalar_prefetch = 0 : i64, scratch_operands = 0 : i64, tpu.core_type = #tpu.core_type<tc>, window_params = [{transform_indices = @transform_0, window_bounds = array<i64: 1, 8, 32>}, {pipeline_mode = #tpu.pipeline_mode<synchronous>, transform_indices = @transform_1, window_bounds = array<i64: 1, 32>}, {pipeline_mode = #tpu.pipeline_mode<synchronous>, transform_indices = @transform_2, window_bounds = array<i64: 1, 32>}, {pipeline_mode = #tpu.pipeline_mode<synchronous>, transform_indices = @transform_3, window_bounds = array<i64: 32, 96>}, {pipeline_mode = #tpu.pipeline_mode<synchronous>, transform_indices = @transform_4, window_bounds = array<i64: 32, 32>}, {pipeline_mode = #tpu.pipeline_mode<synchronous>, transform_indices = @transform_5, window_bounds = array<i64: 1, 32>}, {pipeline_mode = #tpu.pipeline_mode<synchronous>, transform_indices = @transform_6, window_bounds = array<i64: 1, 32>}, {pipeline_mode = #tpu.pipeline_mode<synchronous>, transform_indices = @transform_7, window_bounds = array<i64: 1, 32>}, {pipeline_mode = #tpu.pipeline_mode<synchronous>, transform_indices = @transform_8, window_bounds = array<i64: 32, 128>}, {pipeline_mode = #tpu.pipeline_mode<synchronous>, transform_indices = @transform_9, window_bounds = array<i64: 1, 128>}, {pipeline_mode = #tpu.pipeline_mode<synchronous>, transform_indices = @transform_10, window_bounds = array<i64: 128, 32>}, {pipeline_mode = #tpu.pipeline_mode<synchronous>, transform_indices = @transform_11, window_bounds = array<i64: 1, 32>}, {transform_indices = @transform_12, window_bounds = array<i64: 1, 8, 32>}]} {
    %c0 = arith.constant 0 : index
    %c0_0 = arith.constant 0 : index
    %c0_1 = arith.constant 0 : index
    %0 = vector.load %arg1[%c0, %c0_0, %c0_1] : memref<1x8x32xf32, #tpu.memory_space<vmem>>, vector<1x8x32xf32>
    %1 = vector.shape_cast %0 : vector<1x8x32xf32> to vector<8x32xf32>
    %c0_2 = arith.constant 0 : index
    %c0_3 = arith.constant 0 : index
    %2 = vector.load %arg2[%c0_2, %c0_3] : memref<1x32xf32, #tpu.memory_space<vmem>>, vector<1x32xf32>
    %3 = vector.shape_cast %2 : vector<1x32xf32> to vector<32xf32>
    %c0_4 = arith.constant 0 : index
    %c0_5 = arith.constant 0 : index
    %4 = vector.load %arg3[%c0_4, %c0_5] : memref<1x32xf32, #tpu.memory_space<vmem>>, vector<1x32xf32>
    %5 = vector.shape_cast %4 : vector<1x32xf32> to vector<32xf32>
    %cst = arith.constant dense<0.000000e+00> : vector<8xf32>
    %6 = vector.multi_reduction <add>, %1, %cst [1] : vector<8x32xf32> to vector<8xf32>
    %7 = vector.shape_cast %6 : vector<8xf32> to vector<8x1xf32>
    %cst_6 = arith.constant 3.200000e+01 : f32
    %8 = vector.broadcast %cst_6 : f32 to vector<8x1xf32>
    %9 = arith.divf %7, %8 : vector<8x1xf32>
    %10 = vector.broadcast %9 : vector<8x1xf32> to vector<8x32xf32>
    %11 = arith.subf %1, %10 : vector<8x32xf32>
    %12 = arith.mulf %11, %11 : vector<8x32xf32>
    %cst_7 = arith.constant dense<0.000000e+00> : vector<8xf32>
    %13 = vector.multi_reduction <add>, %12, %cst_7 [1] : vector<8x32xf32> to vector<8xf32>
    %14 = vector.shape_cast %13 : vector<8xf32> to vector<8x1xf32>
    %cst_8 = arith.constant 3.200000e+01 : f32
    %15 = vector.broadcast %cst_8 : f32 to vector<8x1xf32>
    %16 = arith.divf %14, %15 : vector<8x1xf32>
    %cst_9 = arith.constant 9.99999974E-6 : f32
    %17 = vector.broadcast %cst_9 : f32 to vector<8x1xf32>
    %18 = arith.addf %16, %17 : vector<8x1xf32>
    %19 = math.rsqrt %18 : vector<8x1xf32>
    %20 = vector.broadcast %19 : vector<8x1xf32> to vector<8x32xf32>
    %21 = arith.mulf %11, %20 : vector<8x32xf32>
    %22 = vector.shape_cast %3 : vector<32xf32> to vector<1x32xf32>
    %23 = vector.broadcast %22 : vector<1x32xf32> to vector<8x32xf32>
    %24 = arith.mulf %21, %23 : vector<8x32xf32>
    %25 = vector.shape_cast %5 : vector<32xf32> to vector<1x32xf32>
    %26 = vector.broadcast %25 : vector<1x32xf32> to vector<8x32xf32>
    %27 = arith.addf %24, %26 : vector<8x32xf32>
    %28 = arith.truncf %27 : vector<8x32xf32> to vector<8x32xbf16>
    %c0_10 = arith.constant 0 : index
    %c0_11 = arith.constant 0 : index
    %29 = vector.load %arg4[%c0_10, %c0_11] : memref<32x96xbf16, #tpu.memory_space<vmem>>, vector<32x96xbf16>
    %cst_12 = arith.constant dense<0.000000e+00> : vector<8x96xf32>
    %30 = tpu.matmul %28, %29, %cst_12 {dimension_numbers = #tpu.dot_dimension_numbers<[1], [0], [0], [1], [0, 0, 1, 1], [], []>} : vector<8x32xbf16>, vector<32x96xbf16>, vector<8x96xf32> -> vector<8x96xf32>
    %31 = vector.extract_strided_slice %30 {offsets = [0, 0], sizes = [8, 8], strides = [1, 1]} : vector<8x96xf32> to vector<8x8xf32>
    %cst_13 = arith.constant 0.353553385 : f32
    %32 = vector.broadcast %cst_13 : f32 to vector<8x8xf32>
    %33 = arith.mulf %31, %32 : vector<8x8xf32>
    %34 = arith.truncf %33 : vector<8x8xf32> to vector<8x8xbf16>
    %35 = vector.extract_strided_slice %30 {offsets = [0, 32], sizes = [8, 8], strides = [1, 1]} : vector<8x96xf32> to vector<8x8xf32>
    %36 = arith.truncf %35 : vector<8x8xf32> to vector<8x8xbf16>
    %37 = vector.extract_strided_slice %30 {offsets = [0, 64], sizes = [8, 8], strides = [1, 1]} : vector<8x96xf32> to vector<8x8xf32>
    %38 = arith.truncf %37 : vector<8x8xf32> to vector<8x8xbf16>
    %39 = tpu.transpose %36, [1, 0] : vector<8x8xbf16> -> vector<8x8xbf16>
    %cst_14 = arith.constant dense<0.000000e+00> : vector<8x8xf32>
    %40 = tpu.matmul %34, %39, %cst_14 {dimension_numbers = #tpu.dot_dimension_numbers<[1], [0], [0], [1], [0, 0, 1, 1], [], []>} : vector<8x8xbf16>, vector<8x8xbf16>, vector<8x8xf32> -> vector<8x8xf32>
    %cst_15 = arith.constant dense<0xFF800000> : vector<8xf32>
    %41 = vector.multi_reduction <maximumf>, %40, %cst_15 [1] : vector<8x8xf32> to vector<8xf32>
    %42 = vector.shape_cast %41 : vector<8xf32> to vector<8x1xf32>
    %43 = vector.broadcast %42 : vector<8x1xf32> to vector<8x8xf32>
    %44 = arith.subf %40, %43 : vector<8x8xf32>
    %45 = math.exp %44 : vector<8x8xf32>
    %cst_16 = arith.constant dense<0.000000e+00> : vector<8xf32>
    %46 = vector.multi_reduction <add>, %45, %cst_16 [1] : vector<8x8xf32> to vector<8xf32>
    %47 = vector.shape_cast %46 : vector<8xf32> to vector<8x1xf32>
    %48 = arith.truncf %45 : vector<8x8xf32> to vector<8x8xbf16>
    %cst_17 = arith.constant dense<0.000000e+00> : vector<8x8xf32>
    %49 = tpu.matmul %48, %38, %cst_17 {dimension_numbers = #tpu.dot_dimension_numbers<[1], [0], [0], [1], [0, 0, 1, 1], [], []>} : vector<8x8xbf16>, vector<8x8xbf16>, vector<8x8xf32> -> vector<8x8xf32>
    %50 = tpu.reciprocal %47 {approx = true} : vector<8x1xf32> -> vector<8x1xf32>
    %51 = vector.broadcast %50 : vector<8x1xf32> to vector<8x8xf32>
    %52 = arith.mulf %49, %51 : vector<8x8xf32>
    %53 = vector.extract_strided_slice %30 {offsets = [0, 8], sizes = [8, 8], strides = [1, 1]} : vector<8x96xf32> to vector<8x8xf32>
    %cst_18 = arith.constant 0.353553385 : f32
    %54 = vector.broadcast %cst_18 : f32 to vector<8x8xf32>
    %55 = arith.mulf %53, %54 : vector<8x8xf32>
    %56 = arith.truncf %55 : vector<8x8xf32> to vector<8x8xbf16>
    %57 = vector.extract_strided_slice %30 {offsets = [0, 40], sizes = [8, 8], strides = [1, 1]} : vector<8x96xf32> to vector<8x8xf32>
    %58 = arith.truncf %57 : vector<8x8xf32> to vector<8x8xbf16>
    %59 = vector.extract_strided_slice %30 {offsets = [0, 72], sizes = [8, 8], strides = [1, 1]} : vector<8x96xf32> to vector<8x8xf32>
    %60 = arith.truncf %59 : vector<8x8xf32> to vector<8x8xbf16>
    %61 = tpu.transpose %58, [1, 0] : vector<8x8xbf16> -> vector<8x8xbf16>
    %cst_19 = arith.constant dense<0.000000e+00> : vector<8x8xf32>
    %62 = tpu.matmul %56, %61, %cst_19 {dimension_numbers = #tpu.dot_dimension_numbers<[1], [0], [0], [1], [0, 0, 1, 1], [], []>} : vector<8x8xbf16>, vector<8x8xbf16>, vector<8x8xf32> -> vector<8x8xf32>
    %cst_20 = arith.constant dense<0xFF800000> : vector<8xf32>
    %63 = vector.multi_reduction <maximumf>, %62, %cst_20 [1] : vector<8x8xf32> to vector<8xf32>
    %64 = vector.shape_cast %63 : vector<8xf32> to vector<8x1xf32>
    %65 = vector.broadcast %64 : vector<8x1xf32> to vector<8x8xf32>
    %66 = arith.subf %62, %65 : vector<8x8xf32>
    %67 = math.exp %66 : vector<8x8xf32>
    %cst_21 = arith.constant dense<0.000000e+00> : vector<8xf32>
    %68 = vector.multi_reduction <add>, %67, %cst_21 [1] : vector<8x8xf32> to vector<8xf32>
    %69 = vector.shape_cast %68 : vector<8xf32> to vector<8x1xf32>
    %70 = arith.truncf %67 : vector<8x8xf32> to vector<8x8xbf16>
    %cst_22 = arith.constant dense<0.000000e+00> : vector<8x8xf32>
    %71 = tpu.matmul %70, %60, %cst_22 {dimension_numbers = #tpu.dot_dimension_numbers<[1], [0], [0], [1], [0, 0, 1, 1], [], []>} : vector<8x8xbf16>, vector<8x8xbf16>, vector<8x8xf32> -> vector<8x8xf32>
    %72 = tpu.reciprocal %69 {approx = true} : vector<8x1xf32> -> vector<8x1xf32>
    %73 = vector.broadcast %72 : vector<8x1xf32> to vector<8x8xf32>
    %74 = arith.mulf %71, %73 : vector<8x8xf32>
    %75 = vector.extract_strided_slice %30 {offsets = [0, 16], sizes = [8, 8], strides = [1, 1]} : vector<8x96xf32> to vector<8x8xf32>
    %cst_23 = arith.constant 0.353553385 : f32
    %76 = vector.broadcast %cst_23 : f32 to vector<8x8xf32>
    %77 = arith.mulf %75, %76 : vector<8x8xf32>
    %78 = arith.truncf %77 : vector<8x8xf32> to vector<8x8xbf16>
    %79 = vector.extract_strided_slice %30 {offsets = [0, 48], sizes = [8, 8], strides = [1, 1]} : vector<8x96xf32> to vector<8x8xf32>
    %80 = arith.truncf %79 : vector<8x8xf32> to vector<8x8xbf16>
    %81 = vector.extract_strided_slice %30 {offsets = [0, 80], sizes = [8, 8], strides = [1, 1]} : vector<8x96xf32> to vector<8x8xf32>
    %82 = arith.truncf %81 : vector<8x8xf32> to vector<8x8xbf16>
    %83 = tpu.transpose %80, [1, 0] : vector<8x8xbf16> -> vector<8x8xbf16>
    %cst_24 = arith.constant dense<0.000000e+00> : vector<8x8xf32>
    %84 = tpu.matmul %78, %83, %cst_24 {dimension_numbers = #tpu.dot_dimension_numbers<[1], [0], [0], [1], [0, 0, 1, 1], [], []>} : vector<8x8xbf16>, vector<8x8xbf16>, vector<8x8xf32> -> vector<8x8xf32>
    %cst_25 = arith.constant dense<0xFF800000> : vector<8xf32>
    %85 = vector.multi_reduction <maximumf>, %84, %cst_25 [1] : vector<8x8xf32> to vector<8xf32>
    %86 = vector.shape_cast %85 : vector<8xf32> to vector<8x1xf32>
    %87 = vector.broadcast %86 : vector<8x1xf32> to vector<8x8xf32>
    %88 = arith.subf %84, %87 : vector<8x8xf32>
    %89 = math.exp %88 : vector<8x8xf32>
    %cst_26 = arith.constant dense<0.000000e+00> : vector<8xf32>
    %90 = vector.multi_reduction <add>, %89, %cst_26 [1] : vector<8x8xf32> to vector<8xf32>
    %91 = vector.shape_cast %90 : vector<8xf32> to vector<8x1xf32>
    %92 = arith.truncf %89 : vector<8x8xf32> to vector<8x8xbf16>
    %cst_27 = arith.constant dense<0.000000e+00> : vector<8x8xf32>
    %93 = tpu.matmul %92, %82, %cst_27 {dimension_numbers = #tpu.dot_dimension_numbers<[1], [0], [0], [1], [0, 0, 1, 1], [], []>} : vector<8x8xbf16>, vector<8x8xbf16>, vector<8x8xf32> -> vector<8x8xf32>
    %94 = tpu.reciprocal %91 {approx = true} : vector<8x1xf32> -> vector<8x1xf32>
    %95 = vector.broadcast %94 : vector<8x1xf32> to vector<8x8xf32>
    %96 = arith.mulf %93, %95 : vector<8x8xf32>
    %97 = vector.extract_strided_slice %30 {offsets = [0, 24], sizes = [8, 8], strides = [1, 1]} : vector<8x96xf32> to vector<8x8xf32>
    %cst_28 = arith.constant 0.353553385 : f32
    %98 = vector.broadcast %cst_28 : f32 to vector<8x8xf32>
    %99 = arith.mulf %97, %98 : vector<8x8xf32>
    %100 = arith.truncf %99 : vector<8x8xf32> to vector<8x8xbf16>
    %101 = vector.extract_strided_slice %30 {offsets = [0, 56], sizes = [8, 8], strides = [1, 1]} : vector<8x96xf32> to vector<8x8xf32>
    %102 = arith.truncf %101 : vector<8x8xf32> to vector<8x8xbf16>
    %103 = vector.extract_strided_slice %30 {offsets = [0, 88], sizes = [8, 8], strides = [1, 1]} : vector<8x96xf32> to vector<8x8xf32>
    %104 = arith.truncf %103 : vector<8x8xf32> to vector<8x8xbf16>
    %105 = tpu.transpose %102, [1, 0] : vector<8x8xbf16> -> vector<8x8xbf16>
    %cst_29 = arith.constant dense<0.000000e+00> : vector<8x8xf32>
    %106 = tpu.matmul %100, %105, %cst_29 {dimension_numbers = #tpu.dot_dimension_numbers<[1], [0], [0], [1], [0, 0, 1, 1], [], []>} : vector<8x8xbf16>, vector<8x8xbf16>, vector<8x8xf32> -> vector<8x8xf32>
    %cst_30 = arith.constant dense<0xFF800000> : vector<8xf32>
    %107 = vector.multi_reduction <maximumf>, %106, %cst_30 [1] : vector<8x8xf32> to vector<8xf32>
    %108 = vector.shape_cast %107 : vector<8xf32> to vector<8x1xf32>
    %109 = vector.broadcast %108 : vector<8x1xf32> to vector<8x8xf32>
    %110 = arith.subf %106, %109 : vector<8x8xf32>
    %111 = math.exp %110 : vector<8x8xf32>
    %cst_31 = arith.constant dense<0.000000e+00> : vector<8xf32>
    %112 = vector.multi_reduction <add>, %111, %cst_31 [1] : vector<8x8xf32> to vector<8xf32>
    %113 = vector.shape_cast %112 : vector<8xf32> to vector<8x1xf32>
    %114 = arith.truncf %111 : vector<8x8xf32> to vector<8x8xbf16>
    %cst_32 = arith.constant dense<0.000000e+00> : vector<8x8xf32>
    %115 = tpu.matmul %114, %104, %cst_32 {dimension_numbers = #tpu.dot_dimension_numbers<[1], [0], [0], [1], [0, 0, 1, 1], [], []>} : vector<8x8xbf16>, vector<8x8xbf16>, vector<8x8xf32> -> vector<8x8xf32>
    %116 = tpu.reciprocal %113 {approx = true} : vector<8x1xf32> -> vector<8x1xf32>
    %117 = vector.broadcast %116 : vector<8x1xf32> to vector<8x8xf32>
    %118 = arith.mulf %115, %117 : vector<8x8xf32>
    %119 = tpu.concatenate %52, %74, %96, %118 in 1 : vector<8x8xf32>, vector<8x8xf32>, vector<8x8xf32>, vector<8x8xf32> -> vector<8x32xf32>
    %120 = arith.truncf %119 : vector<8x32xf32> to vector<8x32xbf16>
    %c0_33 = arith.constant 0 : index
    %c0_34 = arith.constant 0 : index
    %121 = vector.load %arg5[%c0_33, %c0_34] : memref<32x32xbf16, #tpu.memory_space<vmem>>, vector<32x32xbf16>
    %cst_35 = arith.constant dense<0.000000e+00> : vector<8x32xf32>
    %122 = tpu.matmul %120, %121, %cst_35 {dimension_numbers = #tpu.dot_dimension_numbers<[1], [0], [0], [1], [0, 0, 1, 1], [], []>} : vector<8x32xbf16>, vector<32x32xbf16>, vector<8x32xf32> -> vector<8x32xf32>
    %c0_36 = arith.constant 0 : index
    %c0_37 = arith.constant 0 : index
    %123 = vector.load %arg6[%c0_36, %c0_37] : memref<1x32xf32, #tpu.memory_space<vmem>>, vector<1x32xf32>
    %124 = vector.shape_cast %123 : vector<1x32xf32> to vector<32xf32>
    %125 = vector.shape_cast %124 : vector<32xf32> to vector<1x32xf32>
    %126 = vector.broadcast %125 : vector<1x32xf32> to vector<8x32xf32>
    %127 = arith.addf %122, %126 : vector<8x32xf32>
    %128 = arith.addf %1, %127 : vector<8x32xf32>
    %c0_38 = arith.constant 0 : index
    %c0_39 = arith.constant 0 : index
    %129 = vector.load %arg7[%c0_38, %c0_39] : memref<1x32xf32, #tpu.memory_space<vmem>>, vector<1x32xf32>
    %130 = vector.shape_cast %129 : vector<1x32xf32> to vector<32xf32>
    %c0_40 = arith.constant 0 : index
    %c0_41 = arith.constant 0 : index
    %131 = vector.load %arg8[%c0_40, %c0_41] : memref<1x32xf32, #tpu.memory_space<vmem>>, vector<1x32xf32>
    %132 = vector.shape_cast %131 : vector<1x32xf32> to vector<32xf32>
    %cst_42 = arith.constant dense<0.000000e+00> : vector<8xf32>
    %133 = vector.multi_reduction <add>, %128, %cst_42 [1] : vector<8x32xf32> to vector<8xf32>
    %134 = vector.shape_cast %133 : vector<8xf32> to vector<8x1xf32>
    %cst_43 = arith.constant 3.200000e+01 : f32
    %135 = vector.broadcast %cst_43 : f32 to vector<8x1xf32>
    %136 = arith.divf %134, %135 : vector<8x1xf32>
    %137 = vector.broadcast %136 : vector<8x1xf32> to vector<8x32xf32>
    %138 = arith.subf %128, %137 : vector<8x32xf32>
    %139 = arith.mulf %138, %138 : vector<8x32xf32>
    %cst_44 = arith.constant dense<0.000000e+00> : vector<8xf32>
    %140 = vector.multi_reduction <add>, %139, %cst_44 [1] : vector<8x32xf32> to vector<8xf32>
    %141 = vector.shape_cast %140 : vector<8xf32> to vector<8x1xf32>
    %cst_45 = arith.constant 3.200000e+01 : f32
    %142 = vector.broadcast %cst_45 : f32 to vector<8x1xf32>
    %143 = arith.divf %141, %142 : vector<8x1xf32>
    %cst_46 = arith.constant 9.99999974E-6 : f32
    %144 = vector.broadcast %cst_46 : f32 to vector<8x1xf32>
    %145 = arith.addf %143, %144 : vector<8x1xf32>
    %146 = math.rsqrt %145 : vector<8x1xf32>
    %147 = vector.broadcast %146 : vector<8x1xf32> to vector<8x32xf32>
    %148 = arith.mulf %138, %147 : vector<8x32xf32>
    %149 = vector.shape_cast %130 : vector<32xf32> to vector<1x32xf32>
    %150 = vector.broadcast %149 : vector<1x32xf32> to vector<8x32xf32>
    %151 = arith.mulf %148, %150 : vector<8x32xf32>
    %152 = vector.shape_cast %132 : vector<32xf32> to vector<1x32xf32>
    %153 = vector.broadcast %152 : vector<1x32xf32> to vector<8x32xf32>
    %154 = arith.addf %151, %153 : vector<8x32xf32>
    %155 = arith.truncf %154 : vector<8x32xf32> to vector<8x32xbf16>
    %c0_47 = arith.constant 0 : index
    %c0_48 = arith.constant 0 : index
    %156 = vector.load %arg9[%c0_47, %c0_48] : memref<32x128xbf16, #tpu.memory_space<vmem>>, vector<32x128xbf16>
    %cst_49 = arith.constant dense<0.000000e+00> : vector<8x128xf32>
    %157 = tpu.matmul %155, %156, %cst_49 {dimension_numbers = #tpu.dot_dimension_numbers<[1], [0], [0], [1], [0, 0, 1, 1], [], []>} : vector<8x32xbf16>, vector<32x128xbf16>, vector<8x128xf32> -> vector<8x128xf32>
    %c0_50 = arith.constant 0 : index
    %c0_51 = arith.constant 0 : index
    %158 = vector.load %arg10[%c0_50, %c0_51] : memref<1x128xf32, #tpu.memory_space<vmem>>, vector<1x128xf32>
    %159 = vector.shape_cast %158 : vector<1x128xf32> to vector<128xf32>
    %160 = vector.shape_cast %159 : vector<128xf32> to vector<1x128xf32>
    %161 = vector.broadcast %160 : vector<1x128xf32> to vector<8x128xf32>
    %162 = arith.addf %157, %161 : vector<8x128xf32>
    %cst_52 = arith.constant 5.000000e-01 : f32
    %163 = vector.broadcast %cst_52 : f32 to vector<8x128xf32>
    %164 = arith.mulf %163, %162 : vector<8x128xf32>
    %cst_53 = arith.constant 0.707106769 : f32
    %165 = vector.broadcast %cst_53 : f32 to vector<8x128xf32>
    %166 = arith.mulf %162, %165 : vector<8x128xf32>
    %167 = math.erf %166 : vector<8x128xf32>
    %cst_54 = arith.constant 1.000000e+00 : f32
    %168 = vector.broadcast %cst_54 : f32 to vector<8x128xf32>
    %169 = arith.addf %168, %167 : vector<8x128xf32>
    %170 = arith.mulf %164, %169 : vector<8x128xf32>
    %171 = arith.truncf %170 : vector<8x128xf32> to vector<8x128xbf16>
    %c0_55 = arith.constant 0 : index
    %c0_56 = arith.constant 0 : index
    %172 = vector.load %arg11[%c0_55, %c0_56] : memref<128x32xbf16, #tpu.memory_space<vmem>>, vector<128x32xbf16>
    %cst_57 = arith.constant dense<0.000000e+00> : vector<8x32xf32>
    %173 = tpu.matmul %171, %172, %cst_57 {dimension_numbers = #tpu.dot_dimension_numbers<[1], [0], [0], [1], [0, 0, 1, 1], [], []>} : vector<8x128xbf16>, vector<128x32xbf16>, vector<8x32xf32> -> vector<8x32xf32>
    %c0_58 = arith.constant 0 : index
    %c0_59 = arith.constant 0 : index
    %174 = vector.load %arg12[%c0_58, %c0_59] : memref<1x32xf32, #tpu.memory_space<vmem>>, vector<1x32xf32>
    %175 = vector.shape_cast %174 : vector<1x32xf32> to vector<32xf32>
    %176 = vector.shape_cast %175 : vector<32xf32> to vector<1x32xf32>
    %177 = vector.broadcast %176 : vector<1x32xf32> to vector<8x32xf32>
    %178 = arith.addf %173, %177 : vector<8x32xf32>
    %179 = arith.addf %128, %178 : vector<8x32xf32>
    %c0_60 = arith.constant 0 : index
    %c0_61 = arith.constant 0 : index
    %c0_62 = arith.constant 0 : index
    %180 = vector.load %arg13[%c0_60, %c0_61, %c0_62] : memref<1x8x32xf32, #tpu.memory_space<vmem>>, vector<1x8x32xf32>
    %181 = vector.shape_cast %180 : vector<1x8x32xf32> to vector<8x32xf32>
    %182 = vector.shape_cast %179 : vector<8x32xf32> to vector<1x8x32xf32>
    tpu.vector_store %arg13[%c0_60, %c0_61, %c0_62], %182 {strides = array<i32>} : memref<1x8x32xf32, #tpu.memory_space<vmem>>, vector<1x8x32xf32>,
    return
  }
  func.func @transform_0(%arg0: i32) -> (i32, i32, i32) {
    %c0_i32 = arith.constant 0 : i32
    %c0_i32_0 = arith.constant 0 : i32
    %c0_i32_1 = arith.constant 0 : i32
    return %arg0, %c0_i32, %c0_i32_0 : i32, i32, i32
  }
  func.func @transform_1(%arg0: i32) -> (i32, i32) {
    %c0_i32 = arith.constant 0 : i32
    %c0_i32_0 = arith.constant 0 : i32
    %c0_i32_1 = arith.constant 0 : i32
    return %c0_i32, %c0_i32_0 : i32, i32
  }
  func.func @transform_2(%arg0: i32) -> (i32, i32) {
    %c0_i32 = arith.constant 0 : i32
    %c0_i32_0 = arith.constant 0 : i32
    %c0_i32_1 = arith.constant 0 : i32
    return %c0_i32, %c0_i32_0 : i32, i32
  }
  func.func @transform_3(%arg0: i32) -> (i32, i32) {
    %c0_i32 = arith.constant 0 : i32
    %c0_i32_0 = arith.constant 0 : i32
    %c0_i32_1 = arith.constant 0 : i32
    return %c0_i32, %c0_i32_0 : i32, i32
  }
  func.func @transform_4(%arg0: i32) -> (i32, i32) {
    %c0_i32 = arith.constant 0 : i32
    %c0_i32_0 = arith.constant 0 : i32
    %c0_i32_1 = arith.constant 0 : i32
    return %c0_i32, %c0_i32_0 : i32, i32
  }
  func.func @transform_5(%arg0: i32) -> (i32, i32) {
    %c0_i32 = arith.constant 0 : i32
    %c0_i32_0 = arith.constant 0 : i32
    %c0_i32_1 = arith.constant 0 : i32
    return %c0_i32, %c0_i32_0 : i32, i32
  }
  func.func @transform_6(%arg0: i32) -> (i32, i32) {
    %c0_i32 = arith.constant 0 : i32
    %c0_i32_0 = arith.constant 0 : i32
    %c0_i32_1 = arith.constant 0 : i32
    return %c0_i32, %c0_i32_0 : i32, i32
  }
  func.func @transform_7(%arg0: i32) -> (i32, i32) {
    %c0_i32 = arith.constant 0 : i32
    %c0_i32_0 = arith.constant 0 : i32
    %c0_i32_1 = arith.constant 0 : i32
    return %c0_i32, %c0_i32_0 : i32, i32
  }
  func.func @transform_8(%arg0: i32) -> (i32, i32) {
    %c0_i32 = arith.constant 0 : i32
    %c0_i32_0 = arith.constant 0 : i32
    %c0_i32_1 = arith.constant 0 : i32
    return %c0_i32, %c0_i32_0 : i32, i32
  }
  func.func @transform_9(%arg0: i32) -> (i32, i32) {
    %c0_i32 = arith.constant 0 : i32
    %c0_i32_0 = arith.constant 0 : i32
    %c0_i32_1 = arith.constant 0 : i32
    return %c0_i32, %c0_i32_0 : i32, i32
  }
  func.func @transform_10(%arg0: i32) -> (i32, i32) {
    %c0_i32 = arith.constant 0 : i32
    %c0_i32_0 = arith.constant 0 : i32
    %c0_i32_1 = arith.constant 0 : i32
    return %c0_i32, %c0_i32_0 : i32, i32
  }
  func.func @transform_11(%arg0: i32) -> (i32, i32) {
    %c0_i32 = arith.constant 0 : i32
    %c0_i32_0 = arith.constant 0 : i32
    %c0_i32_1 = arith.constant 0 : i32
    return %c0_i32, %c0_i32_0 : i32, i32
  }
  func.func @transform_12(%arg0: i32) -> (i32, i32, i32) {
    %c0_i32 = arith.constant 0 : i32
    %c0_i32_0 = arith.constant 0 : i32
    %c0_i32_1 = arith.constant 0 : i32
    return %arg0, %c0_i32, %c0_i32_0 : i32, i32, i32
  }
}

module attributes {stable_mosaic.version = 11 : i64} {
  func.func @block_kernel(%arg0: i32, %arg1: memref<1x8x32xf32, #tpu.memory_space<vmem>>, %arg2: memref<1x32xf32, #tpu.memory_space<vmem>>, %arg3: memref<1x32xf32, #tpu.memory_space<vmem>>, %arg4: memref<32x96xbf16, #tpu.memory_space<vmem>>, %arg5: memref<32x32xbf16, #tpu.memory_space<vmem>>, %arg6: memref<1x32xf32, #tpu.memory_space<vmem>>, %arg7: memref<1x32xf32, #tpu.memory_space<vmem>>, %arg8: memref<1x32xf32, #tpu.memory_space<vmem>>, %arg9: memref<32x128xbf16, #tpu.memory_space<vmem>>, %arg10: memref<1x128xf32, #tpu.memory_space<vmem>>, %arg11: memref<128x32xbf16, #tpu.memory_space<vmem>>, %arg12: memref<1x32xf32, #tpu.memory_space<vmem>>, %arg13: memref<1x8x32xf32, #tpu.memory_space<vmem>>) attributes {dimension_semantics = [#tpu.dimension_semantics<parallel>], iteration_bounds = array<i64: 2>, scalar_prefetch = 0 : i64, scratch_operands = 0 : i64, tpu.core_type = #tpu.core_type<tc>, window_params = [{transform_indices = @transform_0, window_bounds = array<i64: 1, 8, 32>}, {pipeline_mode = #tpu.pipeline_mode<synchronous>, transform_indices = @transform_1, window_bounds = array<i64: 1, 32>}, {pipeline_mode = #tpu.pipeline_mode<synchronous>, transform_indices = @transform_2, window_bounds = array<i64: 1, 32>}, {pipeline_mode = #tpu.pipeline_mode<synchronous>, transform_indices = @transform_3, window_bounds = array<i64: 32, 96>}, {pipeline_mode = #tpu.pipeline_mode<synchronous>, transform_indices = @transform_4, window_bounds = array<i64: 32, 32>}, {pipeline_mode = #tpu.pipeline_mode<synchronous>, transform_indices = @transform_5, window_bounds = array<i64: 1, 32>}, {pipeline_mode = #tpu.pipeline_mode<synchronous>, transform_indices = @transform_6, window_bounds = array<i64: 1, 32>}, {pipeline_mode = #tpu.pipeline_mode<synchronous>, transform_indices = @transform_7, window_bounds = array<i64: 1, 32>}, {pipeline_mode = #tpu.pipeline_mode<synchronous>, transform_indices = @transform_8, window_bounds = array<i64: 32, 128>}, {pipeline_mode = #tpu.pipeline_mode<synchronous>, transform_indices = @transform_9, window_bounds = array<i64: 1, 128>}, {pipeline_mode = #tpu.pipeline_mode<synchronous>, transform_indices = @transform_10, window_bounds = array<i64: 128, 32>}, {pipeline_mode = #tpu.pipeline_mode<synchronous>, transform_indices = @transform_11, window_bounds = array<i64: 1, 32>}, {transform_indices = @transform_12, window_bounds = array<i64: 1, 8, 32>}]} {
    %c0 = arith.constant 0 : index
    %c0_0 = arith.constant 0 : index
    %c0_1 = arith.constant 0 : index
    %0 = vector.load %arg1[%c0, %c0_0, %c0_1] : memref<1x8x32xf32, #tpu.memory_space<vmem>>, vector<1x8x32xf32>
    %1 = vector.shape_cast %0 : vector<1x8x32xf32> to vector<8x32xf32>
    %c0_2 = arith.constant 0 : index
    %c0_3 = arith.constant 0 : index
    %2 = vector.load %arg2[%c0_2, %c0_3] : memref<1x32xf32, #tpu.memory_space<vmem>>, vector<1x32xf32>
    %3 = vector.shape_cast %2 : vector<1x32xf32> to vector<32xf32>
    %c0_4 = arith.constant 0 : index
    %c0_5 = arith.constant 0 : index
    %4 = vector.load %arg3[%c0_4, %c0_5] : memref<1x32xf32, #tpu.memory_space<vmem>>, vector<1x32xf32>
    %5 = vector.shape_cast %4 : vector<1x32xf32> to vector<32xf32>
    %cst = arith.constant dense<0.000000e+00> : vector<8xf32>
    %6 = vector.multi_reduction <add>, %1, %cst [1] : vector<8x32xf32> to vector<8xf32>
    %7 = vector.shape_cast %6 : vector<8xf32> to vector<8x1xf32>
    %cst_6 = arith.constant 3.200000e+01 : f32
    %8 = vector.broadcast %cst_6 : f32 to vector<8x1xf32>
    %9 = arith.divf %7, %8 : vector<8x1xf32>
    %10 = vector.broadcast %9 : vector<8x1xf32> to vector<8x32xf32>
    %11 = arith.subf %1, %10 : vector<8x32xf32>
    %12 = arith.mulf %11, %11 : vector<8x32xf32>
    %cst_7 = arith.constant dense<0.000000e+00> : vector<8xf32>
    %13 = vector.multi_reduction <add>, %12, %cst_7 [1] : vector<8x32xf32> to vector<8xf32>
    %14 = vector.shape_cast %13 : vector<8xf32> to vector<8x1xf32>
    %cst_8 = arith.constant 3.200000e+01 : f32
    %15 = vector.broadcast %cst_8 : f32 to vector<8x1xf32>
    %16 = arith.divf %14, %15 : vector<8x1xf32>
    %cst_9 = arith.constant 9.99999974E-6 : f32
    %17 = vector.broadcast %cst_9 : f32 to vector<8x1xf32>
    %18 = arith.addf %16, %17 : vector<8x1xf32>
    %19 = math.rsqrt %18 : vector<8x1xf32>
    %20 = vector.broadcast %19 : vector<8x1xf32> to vector<8x32xf32>
    %21 = arith.mulf %11, %20 : vector<8x32xf32>
    %22 = vector.shape_cast %3 : vector<32xf32> to vector<1x32xf32>
    %23 = vector.broadcast %22 : vector<1x32xf32> to vector<8x32xf32>
    %24 = arith.mulf %21, %23 : vector<8x32xf32>
    %25 = vector.shape_cast %5 : vector<32xf32> to vector<1x32xf32>
    %26 = vector.broadcast %25 : vector<1x32xf32> to vector<8x32xf32>
    %27 = arith.addf %24, %26 : vector<8x32xf32>
    %28 = arith.truncf %27 : vector<8x32xf32> to vector<8x32xbf16>
    %c0_10 = arith.constant 0 : index
    %c0_11 = arith.constant 0 : index
    %29 = vector.load %arg4[%c0_10, %c0_11] : memref<32x96xbf16, #tpu.memory_space<vmem>>, vector<32x96xbf16>
    %cst_12 = arith.constant dense<0.000000e+00> : vector<8x96xf32>
    %30 = tpu.matmul %28, %29, %cst_12 {dimension_numbers = #tpu.dot_dimension_numbers<[1], [0], [0], [1], [0, 0, 1, 1], [], []>} : vector<8x32xbf16>, vector<32x96xbf16>, vector<8x96xf32> -> vector<8x96xf32>
    %31 = vector.extract_strided_slice %30 {offsets = [0, 0], sizes = [8, 8], strides = [1, 1]} : vector<8x96xf32> to vector<8x8xf32>
    %cst_13 = arith.constant 0.353553385 : f32
    %32 = vector.broadcast %cst_13 : f32 to vector<8x8xf32>
    %33 = arith.mulf %31, %32 : vector<8x8xf32>
    %34 = arith.truncf %33 : vector<8x8xf32> to vector<8x8xbf16>
    %35 = vector.extract_strided_slice %30 {offsets = [0, 32], sizes = [8, 8], strides = [1, 1]} : vector<8x96xf32> to vector<8x8xf32>
    %36 = arith.truncf %35 : vector<8x8xf32> to vector<8x8xbf16>
    %37 = vector.extract_strided_slice %30 {offsets = [0, 64], sizes = [8, 8], strides = [1, 1]} : vector<8x96xf32> to vector<8x8xf32>
    %38 = arith.truncf %37 : vector<8x8xf32> to vector<8x8xbf16>
    %39 = tpu.transpose %36, [1, 0] : vector<8x8xbf16> -> vector<8x8xbf16>
    %cst_14 = arith.constant dense<0.000000e+00> : vector<8x8xf32>
    %40 = tpu.matmul %34, %39, %cst_14 {dimension_numbers = #tpu.dot_dimension_numbers<[1], [0], [0], [1], [0, 0, 1, 1], [], []>} : vector<8x8xbf16>, vector<8x8xbf16>, vector<8x8xf32> -> vector<8x8xf32>
    %cst_15 = arith.constant dense<0xFF800000> : vector<8xf32>
    %41 = vector.multi_reduction <maximumf>, %40, %cst_15 [1] : vector<8x8xf32> to vector<8xf32>
    %42 = vector.shape_cast %41 : vector<8xf32> to vector<8x1xf32>
    %43 = vector.broadcast %42 : vector<8x1xf32> to vector<8x8xf32>
    %44 = arith.subf %40, %43 : vector<8x8xf32>
    %45 = math.exp %44 : vector<8x8xf32>
    %cst_16 = arith.constant dense<0.000000e+00> : vector<8xf32>
    %46 = vector.multi_reduction <add>, %45, %cst_16 [1] : vector<8x8xf32> to vector<8xf32>
    %47 = vector.shape_cast %46 : vector<8xf32> to vector<8x1xf32>
    %48 = arith.truncf %45 : vector<8x8xf32> to vector<8x8xbf16>
    %cst_17 = arith.constant dense<0.000000e+00> : vector<8x8xf32>
    %49 = tpu.matmul %48, %38, %cst_17 {dimension_numbers = #tpu.dot_dimension_numbers<[1], [0], [0], [1], [0, 0, 1, 1], [], []>} : vector<8x8xbf16>, vector<8x8xbf16>, vector<8x8xf32> -> vector<8x8xf32>
    %50 = tpu.reciprocal %47 {approx = true} : vector<8x1xf32> -> vector<8x1xf32>
    %51 = vector.broadcast %50 : vector<8x1xf32> to vector<8x8xf32>
    %52 = arith.mulf %49, %51 : vector<8x8xf32>
    %53 = vector.extract_strided_slice %30 {offsets = [0, 8], sizes = [8, 8], strides = [1, 1]} : vector<8x96xf32> to vector<8x8xf32>
    %cst_18 = arith.constant 0.353553385 : f32
    %54 = vector.broadcast %cst_18 : f32 to vector<8x8xf32>
    %55 = arith.mulf %53, %54 : vector<8x8xf32>
    %56 = arith.truncf %55 : vector<8x8xf32> to vector<8x8xbf16>
    %57 = vector.extract_strided_slice %30 {offsets = [0, 40], sizes = [8, 8], strides = [1, 1]} : vector<8x96xf32> to vector<8x8xf32>
    %58 = arith.truncf %57 : vector<8x8xf32> to vector<8x8xbf16>
    %59 = vector.extract_strided_slice %30 {offsets = [0, 72], sizes = [8, 8], strides = [1, 1]} : vector<8x96xf32> to vector<8x8xf32>
    %60 = arith.truncf %59 : vector<8x8xf32> to vector<8x8xbf16>
    %61 = tpu.transpose %58, [1, 0] : vector<8x8xbf16> -> vector<8x8xbf16>
    %cst_19 = arith.constant dense<0.000000e+00> : vector<8x8xf32>
    %62 = tpu.matmul %56, %61, %cst_19 {dimension_numbers = #tpu.dot_dimension_numbers<[1], [0], [0], [1], [0, 0, 1, 1], [], []>} : vector<8x8xbf16>, vector<8x8xbf16>, vector<8x8xf32> -> vector<8x8xf32>
    %cst_20 = arith.constant dense<0xFF800000> : vector<8xf32>
    %63 = vector.multi_reduction <maximumf>, %62, %cst_20 [1] : vector<8x8xf32> to vector<8xf32>
    %64 = vector.shape_cast %63 : vector<8xf32> to vector<8x1xf32>
    %65 = vector.broadcast %64 : vector<8x1xf32> to vector<8x8xf32>
    %66 = arith.subf %62, %65 : vector<8x8xf32>
    %67 = math.exp %66 : vector<8x8xf32>
    %cst_21 = arith.constant dense<0.000000e+00> : vector<8xf32>
    %68 = vector.multi_reduction <add>, %67, %cst_21 [1] : vector<8x8xf32> to vector<8xf32>
    %69 = vector.shape_cast %68 : vector<8xf32> to vector<8x1xf32>
    %70 = arith.truncf %67 : vector<8x8xf32> to vector<8x8xbf16>
    %cst_22 = arith.constant dense<0.000000e+00> : vector<8x8xf32>
    %71 = tpu.matmul %70, %60, %cst_22 {dimension_numbers = #tpu.dot_dimension_numbers<[1], [0], [0], [1], [0, 0, 1, 1], [], []>} : vector<8x8xbf16>, vector<8x8xbf16>, vector<8x8xf32> -> vector<8x8xf32>
    %72 = tpu.reciprocal %69 {approx = true} : vector<8x1xf32> -> vector<8x1xf32>
    %73 = vector.broadcast %72 : vector<8x1xf32> to vector<8x8xf32>
    %74 = arith.mulf %71, %73 : vector<8x8xf32>
    %75 = vector.extract_strided_slice %30 {offsets = [0, 16], sizes = [8, 8], strides = [1, 1]} : vector<8x96xf32> to vector<8x8xf32>
    %cst_23 = arith.constant 0.353553385 : f32
    %76 = vector.broadcast %cst_23 : f32 to vector<8x8xf32>
    %77 = arith.mulf %75, %76 : vector<8x8xf32>
    %78 = arith.truncf %77 : vector<8x8xf32> to vector<8x8xbf16>
    %79 = vector.extract_strided_slice %30 {offsets = [0, 48], sizes = [8, 8], strides = [1, 1]} : vector<8x96xf32> to vector<8x8xf32>
    %80 = arith.truncf %79 : vector<8x8xf32> to vector<8x8xbf16>
    %81 = vector.extract_strided_slice %30 {offsets = [0, 80], sizes = [8, 8], strides = [1, 1]} : vector<8x96xf32> to vector<8x8xf32>
    %82 = arith.truncf %81 : vector<8x8xf32> to vector<8x8xbf16>
    %83 = tpu.transpose %80, [1, 0] : vector<8x8xbf16> -> vector<8x8xbf16>
    %cst_24 = arith.constant dense<0.000000e+00> : vector<8x8xf32>
    %84 = tpu.matmul %78, %83, %cst_24 {dimension_numbers = #tpu.dot_dimension_numbers<[1], [0], [0], [1], [0, 0, 1, 1], [], []>} : vector<8x8xbf16>, vector<8x8xbf16>, vector<8x8xf32> -> vector<8x8xf32>
    %cst_25 = arith.constant dense<0xFF800000> : vector<8xf32>
    %85 = vector.multi_reduction <maximumf>, %84, %cst_25 [1] : vector<8x8xf32> to vector<8xf32>
    %86 = vector.shape_cast %85 : vector<8xf32> to vector<8x1xf32>
    %87 = vector.broadcast %86 : vector<8x1xf32> to vector<8x8xf32>
    %88 = arith.subf %84, %87 : vector<8x8xf32>
    %89 = math.exp %88 : vector<8x8xf32>
    %cst_26 = arith.constant dense<0.000000e+00> : vector<8xf32>
    %90 = vector.multi_reduction <add>, %89, %cst_26 [1] : vector<8x8xf32> to vector<8xf32>
    %91 = vector.shape_cast %90 : vector<8xf32> to vector<8x1xf32>
    %92 = arith.truncf %89 : vector<8x8xf32> to vector<8x8xbf16>
    %cst_27 = arith.constant dense<0.000000e+00> : vector<8x8xf32>
    %93 = tpu.matmul %92, %82, %cst_27 {dimension_numbers = #tpu.dot_dimension_numbers<[1], [0], [0], [1], [0, 0, 1, 1], [], []>} : vector<8x8xbf16>, vector<8x8xbf16>, vector<8x8xf32> -> vector<8x8xf32>
    %94 = tpu.reciprocal %91 {approx = true} : vector<8x1xf32> -> vector<8x1xf32>
    %95 = vector.broadcast %94 : vector<8x1xf32> to vector<8x8xf32>
    %96 = arith.mulf %93, %95 : vector<8x8xf32>
    %97 = vector.extract_strided_slice %30 {offsets = [0, 24], sizes = [8, 8], strides = [1, 1]} : vector<8x96xf32> to vector<8x8xf32>
    %cst_28 = arith.constant 0.353553385 : f32
    %98 = vector.broadcast %cst_28 : f32 to vector<8x8xf32>
    %99 = arith.mulf %97, %98 : vector<8x8xf32>
    %100 = arith.truncf %99 : vector<8x8xf32> to vector<8x8xbf16>
    %101 = vector.extract_strided_slice %30 {offsets = [0, 56], sizes = [8, 8], strides = [1, 1]} : vector<8x96xf32> to vector<8x8xf32>
    %102 = arith.truncf %101 : vector<8x8xf32> to vector<8x8xbf16>
    %103 = vector.extract_strided_slice %30 {offsets = [0, 88], sizes = [8, 8], strides = [1, 1]} : vector<8x96xf32> to vector<8x8xf32>
    %104 = arith.truncf %103 : vector<8x8xf32> to vector<8x8xbf16>
    %105 = tpu.transpose %102, [1, 0] : vector<8x8xbf16> -> vector<8x8xbf16>
    %cst_29 = arith.constant dense<0.000000e+00> : vector<8x8xf32>
    %106 = tpu.matmul %100, %105, %cst_29 {dimension_numbers = #tpu.dot_dimension_numbers<[1], [0], [0], [1], [0, 0, 1, 1], [], []>} : vector<8x8xbf16>, vector<8x8xbf16>, vector<8x8xf32> -> vector<8x8xf32>
    %cst_30 = arith.constant dense<0xFF800000> : vector<8xf32>
    %107 = vector.multi_reduction <maximumf>, %106, %cst_30 [1] : vector<8x8xf32> to vector<8xf32>
    %108 = vector.shape_cast %107 : vector<8xf32> to vector<8x1xf32>
    %109 = vector.broadcast %108 : vector<8x1xf32> to vector<8x8xf32>
    %110 = arith.subf %106, %109 : vector<8x8xf32>
    %111 = math.exp %110 : vector<8x8xf32>
    %cst_31 = arith.constant dense<0.000000e+00> : vector<8xf32>
    %112 = vector.multi_reduction <add>, %111, %cst_31 [1] : vector<8x8xf32> to vector<8xf32>
    %113 = vector.shape_cast %112 : vector<8xf32> to vector<8x1xf32>
    %114 = arith.truncf %111 : vector<8x8xf32> to vector<8x8xbf16>
    %cst_32 = arith.constant dense<0.000000e+00> : vector<8x8xf32>
    %115 = tpu.matmul %114, %104, %cst_32 {dimension_numbers = #tpu.dot_dimension_numbers<[1], [0], [0], [1], [0, 0, 1, 1], [], []>} : vector<8x8xbf16>, vector<8x8xbf16>, vector<8x8xf32> -> vector<8x8xf32>
    %116 = tpu.reciprocal %113 {approx = true} : vector<8x1xf32> -> vector<8x1xf32>
    %117 = vector.broadcast %116 : vector<8x1xf32> to vector<8x8xf32>
    %118 = arith.mulf %115, %117 : vector<8x8xf32>
    %119 = tpu.concatenate %52, %74, %96, %118 in 1 : vector<8x8xf32>, vector<8x8xf32>, vector<8x8xf32>, vector<8x8xf32> -> vector<8x32xf32>
    %120 = arith.truncf %119 : vector<8x32xf32> to vector<8x32xbf16>
    %c0_33 = arith.constant 0 : index
    %c0_34 = arith.constant 0 : index
    %121 = vector.load %arg5[%c0_33, %c0_34] : memref<32x32xbf16, #tpu.memory_space<vmem>>, vector<32x32xbf16>
    %cst_35 = arith.constant dense<0.000000e+00> : vector<8x32xf32>
    %122 = tpu.matmul %120, %121, %cst_35 {dimension_numbers = #tpu.dot_dimension_numbers<[1], [0], [0], [1], [0, 0, 1, 1], [], []>} : vector<8x32xbf16>, vector<32x32xbf16>, vector<8x32xf32> -> vector<8x32xf32>
    %c0_36 = arith.constant 0 : index
    %c0_37 = arith.constant 0 : index
    %123 = vector.load %arg6[%c0_36, %c0_37] : memref<1x32xf32, #tpu.memory_space<vmem>>, vector<1x32xf32>
    %124 = vector.shape_cast %123 : vector<1x32xf32> to vector<32xf32>
    %125 = vector.shape_cast %124 : vector<32xf32> to vector<1x32xf32>
    %126 = vector.broadcast %125 : vector<1x32xf32> to vector<8x32xf32>
    %127 = arith.addf %122, %126 : vector<8x32xf32>
    %128 = arith.addf %1, %127 : vector<8x32xf32>
    %c0_38 = arith.constant 0 : index
    %c0_39 = arith.constant 0 : index
    %129 = vector.load %arg7[%c0_38, %c0_39] : memref<1x32xf32, #tpu.memory_space<vmem>>, vector<1x32xf32>
    %130 = vector.shape_cast %129 : vector<1x32xf32> to vector<32xf32>
    %c0_40 = arith.constant 0 : index
    %c0_41 = arith.constant 0 : index
    %131 = vector.load %arg8[%c0_40, %c0_41] : memref<1x32xf32, #tpu.memory_space<vmem>>, vector<1x32xf32>
    %132 = vector.shape_cast %131 : vector<1x32xf32> to vector<32xf32>
    %cst_42 = arith.constant dense<0.000000e+00> : vector<8xf32>
    %133 = vector.multi_reduction <add>, %128, %cst_42 [1] : vector<8x32xf32> to vector<8xf32>
    %134 = vector.shape_cast %133 : vector<8xf32> to vector<8x1xf32>
    %cst_43 = arith.constant 3.200000e+01 : f32
    %135 = vector.broadcast %cst_43 : f32 to vector<8x1xf32>
    %136 = arith.divf %134, %135 : vector<8x1xf32>
    %137 = vector.broadcast %136 : vector<8x1xf32> to vector<8x32xf32>
    %138 = arith.subf %128, %137 : vector<8x32xf32>
    %139 = arith.mulf %138, %138 : vector<8x32xf32>
    %cst_44 = arith.constant dense<0.000000e+00> : vector<8xf32>
    %140 = vector.multi_reduction <add>, %139, %cst_44 [1] : vector<8x32xf32> to vector<8xf32>
    %141 = vector.shape_cast %140 : vector<8xf32> to vector<8x1xf32>
    %cst_45 = arith.constant 3.200000e+01 : f32
    %142 = vector.broadcast %cst_45 : f32 to vector<8x1xf32>
    %143 = arith.divf %141, %142 : vector<8x1xf32>
    %cst_46 = arith.constant 9.99999974E-6 : f32
    %144 = vector.broadcast %cst_46 : f32 to vector<8x1xf32>
    %145 = arith.addf %143, %144 : vector<8x1xf32>
    %146 = math.rsqrt %145 : vector<8x1xf32>
    %147 = vector.broadcast %146 : vector<8x1xf32> to vector<8x32xf32>
    %148 = arith.mulf %138, %147 : vector<8x32xf32>
    %149 = vector.shape_cast %130 : vector<32xf32> to vector<1x32xf32>
    %150 = vector.broadcast %149 : vector<1x32xf32> to vector<8x32xf32>
    %151 = arith.mulf %148, %150 : vector<8x32xf32>
    %152 = vector.shape_cast %132 : vector<32xf32> to vector<1x32xf32>
    %153 = vector.broadcast %152 : vector<1x32xf32> to vector<8x32xf32>
    %154 = arith.addf %151, %153 : vector<8x32xf32>
    %155 = arith.truncf %154 : vector<8x32xf32> to vector<8x32xbf16>
    %c0_47 = arith.constant 0 : index
    %c0_48 = arith.constant 0 : index
    %156 = vector.load %arg9[%c0_47, %c0_48] : memref<32x128xbf16, #tpu.memory_space<vmem>>, vector<32x128xbf16>
    %cst_49 = arith.constant dense<0.000000e+00> : vector<8x128xf32>
    %157 = tpu.matmul %155, %156, %cst_49 {dimension_numbers = #tpu.dot_dimension_numbers<[1], [0], [0], [1], [0, 0, 1, 1], [], []>} : vector<8x32xbf16>, vector<32x128xbf16>, vector<8x128xf32> -> vector<8x128xf32>
    %c0_50 = arith.constant 0 : index
    %c0_51 = arith.constant 0 : index
    %158 = vector.load %arg10[%c0_50, %c0_51] : memref<1x128xf32, #tpu.memory_space<vmem>>, vector<1x128xf32>
    %159 = vector.shape_cast %158 : vector<1x128xf32> to vector<128xf32>
    %160 = vector.shape_cast %159 : vector<128xf32> to vector<1x128xf32>
    %161 = vector.broadcast %160 : vector<1x128xf32> to vector<8x128xf32>
    %162 = arith.addf %157, %161 : vector<8x128xf32>
    %cst_52 = arith.constant 5.000000e-01 : f32
    %163 = vector.broadcast %cst_52 : f32 to vector<8x128xf32>
    %164 = arith.mulf %163, %162 : vector<8x128xf32>
    %cst_53 = arith.constant 0.707106769 : f32
    %165 = vector.broadcast %cst_53 : f32 to vector<8x128xf32>
    %166 = arith.mulf %162, %165 : vector<8x128xf32>
    %167 = math.erf %166 : vector<8x128xf32>
    %cst_54 = arith.constant 1.000000e+00 : f32
    %168 = vector.broadcast %cst_54 : f32 to vector<8x128xf32>
    %169 = arith.addf %168, %167 : vector<8x128xf32>
    %170 = arith.mulf %164, %169 : vector<8x128xf32>
    %171 = arith.truncf %170 : vector<8x128xf32> to vector<8x128xbf16>
    %c0_55 = arith.constant 0 : index
    %c0_56 = arith.constant 0 : index
    %172 = vector.load %arg11[%c0_55, %c0_56] : memref<128x32xbf16, #tpu.memory_space<vmem>>, vector<128x32xbf16>
    %cst_57 = arith.constant dense<0.000000e+00> : vector<8x32xf32>
    %173 = tpu.matmul %171, %172, %cst_57 {dimension_numbers = #tpu.dot_dimension_numbers<[1], [0], [0], [1], [0, 0, 1, 1], [], []>} : vector<8x128xbf16>, vector<128x32xbf16>, vector<8x32xf32> -> vector<8x32xf32>
    %c0_58 = arith.constant 0 : index
    %c0_59 = arith.constant 0 : index
    %174 = vector.load %arg12[%c0_58, %c0_59] : memref<1x32xf32, #tpu.memory_space<vmem>>, vector<1x32xf32>
    %175 = vector.shape_cast %174 : vector<1x32xf32> to vector<32xf32>
    %176 = vector.shape_cast %175 : vector<32xf32> to vector<1x32xf32>
    %177 = vector.broadcast %176 : vector<1x32xf32> to vector<8x32xf32>
    %178 = arith.addf %173, %177 : vector<8x32xf32>
    %179 = arith.addf %128, %178 : vector<8x32xf32>
    %c0_60 = arith.constant 0 : index
    %c0_61 = arith.constant 0 : index
    %c0_62 = arith.constant 0 : index
    %180 = vector.load %arg13[%c0_60, %c0_61, %c0_62] : memref<1x8x32xf32, #tpu.memory_space<vmem>>, vector<1x8x32xf32>
    %181 = vector.shape_cast %180 : vector<1x8x32xf32> to vector<8x32xf32>
    %182 = vector.shape_cast %179 : vector<8x32xf32> to vector<1x8x32xf32>
    tpu.vector_store %arg13[%c0_60, %c0_61, %c0_62], %182 {strides = array<i32>} : memref<1x8x32xf32, #tpu.memory_space<vmem>>, vector<1x8x32xf32>,
    return
  }
  func.func @transform_0(%arg0: i32) -> (i32, i32, i32) {
    %c0_i32 = arith.constant 0 : i32
    %c0_i32_0 = arith.constant 0 : i32
    %c0_i32_1 = arith.constant 0 : i32
    return %arg0, %c0_i32, %c0_i32_0 : i32, i32, i32
  }
  func.func @transform_1(%arg0: i32) -> (i32, i32) {
    %c0_i32 = arith.constant 0 : i32
    %c0_i32_0 = arith.constant 0 : i32
    %c0_i32_1 = arith.constant 0 : i32
    return %c0_i32, %c0_i32_0 : i32, i32
  }
  func.func @transform_2(%arg0: i32) -> (i32, i32) {
    %c0_i32 = arith.constant 0 : i32
    %c0_i32_0 = arith.constant 0 : i32
    %c0_i32_1 = arith.constant 0 : i32
    return %c0_i32, %c0_i32_0 : i32, i32
  }
  func.func @transform_3(%arg0: i32) -> (i32, i32) {
    %c0_i32 = arith.constant 0 : i32
    %c0_i32_0 = arith.constant 0 : i32
    %c0_i32_1 = arith.constant 0 : i32
    return %c0_i32, %c0_i32_0 : i32, i32
  }
  func.func @transform_4(%arg0: i32) -> (i32, i32) {
    %c0_i32 = arith.constant 0 : i32
    %c0_i32_0 = arith.constant 0 : i32
    %c0_i32_1 = arith.constant 0 : i32
    return %c0_i32, %c0_i32_0 : i32, i32
  }
  func.func @transform_5(%arg0: i32) -> (i32, i32) {
    %c0_i32 = arith.constant 0 : i32
    %c0_i32_0 = arith.constant 0 : i32
    %c0_i32_1 = arith.constant 0 : i32
    return %c0_i32, %c0_i32_0 : i32, i32
  }
  func.func @transform_6(%arg0: i32) -> (i32, i32) {
    %c0_i32 = arith.constant 0 : i32
    %c0_i32_0 = arith.constant 0 : i32
    %c0_i32_1 = arith.constant 0 : i32
    return %c0_i32, %c0_i32_0 : i32, i32
  }
  func.func @transform_7(%arg0: i32) -> (i32, i32) {
    %c0_i32 = arith.constant 0 : i32
    %c0_i32_0 = arith.constant 0 : i32
    %c0_i32_1 = arith.constant 0 : i32
    return %c0_i32, %c0_i32_0 : i32, i32
  }
  func.func @transform_8(%arg0: i32) -> (i32, i32) {
    %c0_i32 = arith.constant 0 : i32
    %c0_i32_0 = arith.constant 0 : i32
    %c0_i32_1 = arith.constant 0 : i32
    return %c0_i32, %c0_i32_0 : i32, i32
  }
  func.func @transform_9(%arg0: i32) -> (i32, i32) {
    %c0_i32 = arith.constant 0 : i32
    %c0_i32_0 = arith.constant 0 : i32
    %c0_i32_1 = arith.constant 0 : i32
    return %c0_i32, %c0_i32_0 : i32, i32
  }
  func.func @transform_10(%arg0: i32) -> (i32, i32) {
    %c0_i32 = arith.constant 0 : i32
    %c0_i32_0 = arith.constant 0 : i32
    %c0_i32_1 = arith.constant 0 : i32
    return %c0_i32, %c0_i32_0 : i32, i32
  }
  func.func @transform_11(%arg0: i32) -> (i32, i32) {
    %c0_i32 = arith.constant 0 : i32
    %c0_i32_0 = arith.constant 0 : i32
    %c0_i32_1 = arith.constant 0 : i32
    return %c0_i32, %c0_i32_0 : i32, i32
  }
  func.func @transform_12(%arg0: i32) -> (i32, i32, i32) {
    %c0_i32 = arith.constant 0 : i32
    %c0_i32_0 = arith.constant 0 : i32
    %c0_i32_1 = arith.constant 0 : i32
    return %arg0, %c0_i32, %c0_i32_0 : i32, i32, i32
  }
}

</mosaic_0001>

<llo_original>
// kernel: tpu_custom_call.1
$region0: #{tpu_custom_call.1}
  #allocation0 [shape = 'u32[]', space=smem, size = 0x4, offset = 0x4, fixed_abs, tag = 'smem constant byte address 0x4 - core index']
  #allocation1 [shape = 'u32[72,128]{1,0:T(1,128)}', space=vmem, size = 0x9000, scoped, tag = 'internal scratch']
  %s0 = inlined_call_operand.vmem [shape: f32[2,8,32], index: 0, kind: input, shape index: {}]
  %s1 = inlined_call_operand.vmem [shape: f32[1,32], index: 1, kind: input, shape index: {}]
  %s2 = inlined_call_operand.vmem [shape: f32[1,32], index: 2, kind: input, shape index: {}]
  %s3 = inlined_call_operand.vmem [shape: bf16[32,96], index: 3, kind: input, shape index: {}]
  %s4 = inlined_call_operand.vmem [shape: bf16[32,32], index: 4, kind: input, shape index: {}]
  %s5 = inlined_call_operand.vmem [shape: f32[1,32], index: 5, kind: input, shape index: {}]
  %s6 = inlined_call_operand.vmem [shape: f32[1,32], index: 6, kind: input, shape index: {}]
  %s7 = inlined_call_operand.vmem [shape: f32[1,32], index: 7, kind: input, shape index: {}]
  %s8 = inlined_call_operand.vmem [shape: bf16[32,128], index: 8, kind: input, shape index: {}]
  %s9 = inlined_call_operand.vmem [shape: f32[1,128], index: 9, kind: input, shape index: {}]
  %s10 = inlined_call_operand.vmem [shape: bf16[128,32], index: 10, kind: input, shape index: {}]
  %s11 = inlined_call_operand.vmem [shape: f32[1,32], index: 11, kind: input, shape index: {}]
  %s12 = inlined_call_operand.hbm [shape: f32[2,8,32], index: 12, kind: output, shape index: {}]
  %s13 = sld [smem:[#allocation0]]
  $region81: #{tpu_custom_call.1} parent=0
    _
  %s15 = ssub.s32 1, %s13
  %s16 = scalar_select 0, %s15, %s13
  $region1: #{tpu_custom_call.1} parent=0
    #allocation2 [shape = 'u8[8192]{0}', space=vmem, size = 0x2000, scoped, tag = 'output window, operand 0']
    #allocation3 [shape = 's32[2]{0}', space=sflag, size = 0x8, scoped, tag = 'scoped memory for tpu_custom_call.1']
    %17 = vsyncpa [#allocation3], 0
    %s18 = scalar_lea.sflag [#allocation3], 1
    %19 = vsyncpa %s18, 0
    loop: start=0, step=1, limit=4
    $region2: #{tpu_custom_call.1} parent=1 // loop_pre_header
      _
    $region3: #{tpu_custom_call.1} parent=1 // loop_header
      %s21 = sphi 0, %s25
      %p22 = scmp.ge.s32.totalorder %s21, 4
      %s31 = sphi 0, %s33
      %s34 = sphi 0, %s31
      %s35 = sphi 0, %s34
      %s51 = sphi 0, %s35
      %s55 = sphi 0, %s55
      %s57 = sphi 0, %s55
      %s58 = sphi 0, %s57
      %s72 = sphi 0, %s58
      %s76 = sphi 0, %s76
      %s78 = sphi 0, %s76
      %s79 = sphi 0, %s78
      %s93 = sphi 0, %s79
      %s97 = sphi 0, %s97
      %s99 = sphi 0, %s97
      %s100 = sphi 0, %s99
      %s114 = sphi 0, %s100
      %s118 = sphi 0, %s118
      %s120 = sphi 0, %s118
      %s121 = sphi 0, %s120
      %s135 = sphi 0, %s121
      %s139 = sphi 0, %s139
      %s141 = sphi 0, %s139
      %s142 = sphi 0, %s141
      %s156 = sphi 0, %s142
      %s160 = sphi 0, %s160
      %s162 = sphi 0, %s160
      %s163 = sphi 0, %s162
      %s177 = sphi 0, %s163
      %s181 = sphi 0, %s181
      %s183 = sphi 0, %s181
      %s184 = sphi 0, %s183
      %s198 = sphi 0, %s184
      %s202 = sphi 0, %s202
      %s204 = sphi 0, %s202
      %s205 = sphi 0, %s204
      %s219 = sphi 0, %s205
      %s223 = sphi 0, %s223
      %s225 = sphi 0, %s223
      %s226 = sphi 0, %s225
      %s240 = sphi 0, %s226
      %s244 = sphi 0, %s244
      %s246 = sphi 0, %s244
      %s247 = sphi 0, %s246
      %s261 = sphi 0, %s247
      %s265 = sphi 0, %s265
      %s267 = sphi 0, %s265
      %s268 = sphi 0, %s267
      %s282 = sphi 0, %s268
      %s288 = sphi 0, %s290
      %s291 = sphi 0, %s288
      %s292 = sphi 0, %s291
      %s308 = sphi 0, %s292
    $region4: #{tpu_custom_call.1} parent=1 // loop_header_branch
      %24 = sbr.rel (%p22) target = $region8
    $region5: #{tpu_custom_call.1} parent=1 // loop_body
      %s26 = ssub.s32 %s21, 1
      %s27 = ssub.s32 %s21, 2
      %s28 = sadd.s32 %s21, 1
      %s29 = ssub.s32 %s21, %s28
      %p30 = scmp.eq.s32.totalorder %s29, 0
      %s32 = sadd.s32 %s31, 1
      %s33 = scalar_select %p30, %s31, %s32
      %p36 = pneg %p30
      %p37 = scmp.eq.s32.totalorder %s21, 1
      %p38 = por %p36, %p37
      %p39 = scmp.ne.s32.totalorder %s31, %s34
      %p40 = scmp.eq.s32.totalorder %s21, 0
      %p41 = por %p39, %p40
      %p42 = scmp.ne.s32.totalorder %s31, %s34
      %p43 = scmp.eq.s32.totalorder %s26, 1
      %p44 = por %p42, %p43
      %p45 = scmp.ne.s32.totalorder %s34, %s35
      %p46 = scmp.eq.s32.totalorder %s26, 0
      %p47 = por %p45, %p46
      %p48 = scmp.ne.s32.totalorder %s34, %s35
      %p49 = scmp.eq.s32.totalorder %s27, 1
      %p50 = por %p48, %p49
      %p52 = scmp.ne.s32.totalorder %s35, %s51
      %p53 = scmp.eq.s32.totalorder %s27, 0
      %p54 = por %p52, %p53
      %s56 = sadd.s32 %s55, 1
      %p59 = scmp.eq.s32.totalorder %s21, 1
      %p60 = scmp.ne.s32.totalorder %s55, %s57
      %p61 = scmp.eq.s32.totalorder %s21, 0
      %p62 = por %p60, %p61
      %p63 = scmp.ne.s32.totalorder %s55, %s57
      %p64 = scmp.eq.s32.totalorder %s26, 1
      %p65 = por %p63, %p64
      %p66 = scmp.ne.s32.totalorder %s57, %s58
      %p67 = scmp.eq.s32.totalorder %s26, 0
      %p68 = por %p66, %p67
      %p69 = scmp.ne.s32.totalorder %s57, %s58
      %p70 = scmp.eq.s32.totalorder %s27, 1
      %p71 = por %p69, %p70
      %p73 = scmp.ne.s32.totalorder %s58, %s72
      %p74 = scmp.eq.s32.totalorder %s27, 0
      %p75 = por %p73, %p74
      %s77 = sadd.s32 %s76, 1
      %p80 = scmp.eq.s32.totalorder %s21, 1
      %p81 = scmp.ne.s32.totalorder %s76, %s78
      %p82 = scmp.eq.s32.totalorder %s21, 0
      %p83 = por %p81, %p82
      %p84 = scmp.ne.s32.totalorder %s76, %s78
      %p85 = scmp.eq.s32.totalorder %s26, 1
      %p86 = por %p84, %p85
      %p87 = scmp.ne.s32.totalorder %s78, %s79
      %p88 = scmp.eq.s32.totalorder %s26, 0
      %p89 = por %p87, %p88
      %p90 = scmp.ne.s32.totalorder %s78, %s79
      %p91 = scmp.eq.s32.totalorder %s27, 1
      %p92 = por %p90, %p91
      %p94 = scmp.ne.s32.totalorder %s79, %s93
      %p95 = scmp.eq.s32.totalorder %s27, 0
      %p96 = por %p94, %p95
      %s98 = sadd.s32 %s97, 1
      %p101 = scmp.eq.s32.totalorder %s21, 1
      %p102 = scmp.ne.s32.totalorder %s97, %s99
      %p103 = scmp.eq.s32.totalorder %s21, 0
      %p104 = por %p102, %p103
      %p105 = scmp.ne.s32.totalorder %s97, %s99
      %p106 = scmp.eq.s32.totalorder %s26, 1
      %p107 = por %p105, %p106
      %p108 = scmp.ne.s32.totalorder %s99, %s100
      %p109 = scmp.eq.s32.totalorder %s26, 0
      %p110 = por %p108, %p109
      %p111 = scmp.ne.s32.totalorder %s99, %s100
      %p112 = scmp.eq.s32.totalorder %s27, 1
      %p113 = por %p111, %p112
      %p115 = scmp.ne.s32.totalorder %s100, %s114
      %p116 = scmp.eq.s32.totalorder %s27, 0
      %p117 = por %p115, %p116
      %s119 = sadd.s32 %s118, 1
      %p122 = scmp.eq.s32.totalorder %s21, 1
      %p123 = scmp.ne.s32.totalorder %s118, %s120
      %p124 = scmp.eq.s32.totalorder %s21, 0
      %p125 = por %p123, %p124
      %p126 = scmp.ne.s32.totalorder %s118, %s120
      %p127 = scmp.eq.s32.totalorder %s26, 1
      %p128 = por %p126, %p127
      %p129 = scmp.ne.s32.totalorder %s120, %s121
      %p130 = scmp.eq.s32.totalorder %s26, 0
      %p131 = por %p129, %p130
      %p132 = scmp.ne.s32.totalorder %s120, %s121
      %p133 = scmp.eq.s32.totalorder %s27, 1
      %p134 = por %p132, %p133
      %p136 = scmp.ne.s32.totalorder %s121, %s135
      %p137 = scmp.eq.s32.totalorder %s27, 0
      %p138 = por %p136, %p137
      %s140 = sadd.s32 %s139, 1
      %p143 = scmp.eq.s32.totalorder %s21, 1
      %p144 = scmp.ne.s32.totalorder %s139, %s141
      %p145 = scmp.eq.s32.totalorder %s21, 0
      %p146 = por %p144, %p145
      %p147 = scmp.ne.s32.totalorder %s139, %s141
      %p148 = scmp.eq.s32.totalorder %s26, 1
      %p149 = por %p147, %p148
      %p150 = scmp.ne.s32.totalorder %s141, %s142
      %p151 = scmp.eq.s32.totalorder %s26, 0
      %p152 = por %p150, %p151
      %p153 = scmp.ne.s32.totalorder %s141, %s142
      %p154 = scmp.eq.s32.totalorder %s27, 1
      %p155 = por %p153, %p154
      %p157 = scmp.ne.s32.totalorder %s142, %s156
      %p158 = scmp.eq.s32.totalorder %s27, 0
      %p159 = por %p157, %p158
      %s161 = sadd.s32 %s160, 1
      %p164 = scmp.eq.s32.totalorder %s21, 1
      %p165 = scmp.ne.s32.totalorder %s160, %s162
      %p166 = scmp.eq.s32.totalorder %s21, 0
      %p167 = por %p165, %p166
      %p168 = scmp.ne.s32.totalorder %s160, %s162
      %p169 = scmp.eq.s32.totalorder %s26, 1
      %p170 = por %p168, %p169
      %p171 = scmp.ne.s32.totalorder %s162, %s163
      %p172 = scmp.eq.s32.totalorder %s26, 0
      %p173 = por %p171, %p172
      %p174 = scmp.ne.s32.totalorder %s162, %s163
      %p175 = scmp.eq.s32.totalorder %s27, 1
      %p176 = por %p174, %p175
      %p178 = scmp.ne.s32.totalorder %s163, %s177
      %p179 = scmp.eq.s32.totalorder %s27, 0
      %p180 = por %p178, %p179
      %s182 = sadd.s32 %s181, 1
      %p185 = scmp.eq.s32.totalorder %s21, 1
      %p186 = scmp.ne.s32.totalorder %s181, %s183
      %p187 = scmp.eq.s32.totalorder %s21, 0
      %p188 = por %p186, %p187
      %p189 = scmp.ne.s32.totalorder %s181, %s183
      %p190 = scmp.eq.s32.totalorder %s26, 1
      %p191 = por %p189, %p190
      %p192 = scmp.ne.s32.totalorder %s183, %s184
      %p193 = scmp.eq.s32.totalorder %s26, 0
      %p194 = por %p192, %p193
      %p195 = scmp.ne.s32.totalorder %s183, %s184
      %p196 = scmp.eq.s32.totalorder %s27, 1
      %p197 = por %p195, %p196
      %p199 = scmp.ne.s32.totalorder %s184, %s198
      %p200 = scmp.eq.s32.totalorder %s27, 0
      %p201 = por %p199, %p200
      %s203 = sadd.s32 %s202, 1
      %p206 = scmp.eq.s32.totalorder %s21, 1
      %p207 = scmp.ne.s32.totalorder %s202, %s204
      %p208 = scmp.eq.s32.totalorder %s21, 0
      %p209 = por %p207, %p208
      %p210 = scmp.ne.s32.totalorder %s202, %s204
      %p211 = scmp.eq.s32.totalorder %s26, 1
      %p212 = por %p210, %p211
      %p213 = scmp.ne.s32.totalorder %s204, %s205
      %p214 = scmp.eq.s32.totalorder %s26, 0
      %p215 = por %p213, %p214
      %p216 = scmp.ne.s32.totalorder %s204, %s205
      %p217 = scmp.eq.s32.totalorder %s27, 1
      %p218 = por %p216, %p217
      %p220 = scmp.ne.s32.totalorder %s205, %s219
      %p221 = scmp.eq.s32.totalorder %s27, 0
      %p222 = por %p220, %p221
      %s224 = sadd.s32 %s223, 1
      %p227 = scmp.eq.s32.totalorder %s21, 1
      %p228 = scmp.ne.s32.totalorder %s223, %s225
      %p229 = scmp.eq.s32.totalorder %s21, 0
      %p230 = por %p228, %p229
      %p231 = scmp.ne.s32.totalorder %s223, %s225
      %p232 = scmp.eq.s32.totalorder %s26, 1
      %p233 = por %p231, %p232
      %p234 = scmp.ne.s32.totalorder %s225, %s226
      %p235 = scmp.eq.s32.totalorder %s26, 0
      %p236 = por %p234, %p235
      %p237 = scmp.ne.s32.totalorder %s225, %s226
      %p238 = scmp.eq.s32.totalorder %s27, 1
      %p239 = por %p237, %p238
      %p241 = scmp.ne.s32.totalorder %s226, %s240
      %p242 = scmp.eq.s32.totalorder %s27, 0
      %p243 = por %p241, %p242
      %s245 = sadd.s32 %s244, 1
      %p248 = scmp.eq.s32.totalorder %s21, 1
      %p249 = scmp.ne.s32.totalorder %s244, %s246
      %p250 = scmp.eq.s32.totalorder %s21, 0
      %p251 = por %p249, %p250
      %p252 = scmp.ne.s32.totalorder %s244, %s246
      %p253 = scmp.eq.s32.totalorder %s26, 1
      %p254 = por %p252, %p253
      %p255 = scmp.ne.s32.totalorder %s246, %s247
      %p256 = scmp.eq.s32.totalorder %s26, 0
      %p257 = por %p255, %p256
      %p258 = scmp.ne.s32.totalorder %s246, %s247
      %p259 = scmp.eq.s32.totalorder %s27, 1
      %p260 = por %p258, %p259
      %p262 = scmp.ne.s32.totalorder %s247, %s261
      %p263 = scmp.eq.s32.totalorder %s27, 0
      %p264 = por %p262, %p263
      %s266 = sadd.s32 %s265, 1
      %p269 = scmp.eq.s32.totalorder %s21, 1
      %p270 = scmp.ne.s32.totalorder %s265, %s267
      %p271 = scmp.eq.s32.totalorder %s21, 0
      %p272 = por %p270, %p271
      %p273 = scmp.ne.s32.totalorder %s265, %s267
      %p274 = scmp.eq.s32.totalorder %s26, 1
      %p275 = por %p273, %p274
      %p276 = scmp.ne.s32.totalorder %s267, %s268
      %p277 = scmp.eq.s32.totalorder %s26, 0
      %p278 = por %p276, %p277
      %p279 = scmp.ne.s32.totalorder %s267, %s268
      %p280 = scmp.eq.s32.totalorder %s27, 1
      %p281 = por %p279, %p280
      %p283 = scmp.ne.s32.totalorder %s268, %s282
      %p284 = scmp.eq.s32.totalorder %s27, 0
      %p285 = por %p283, %p284
      %s286 = ssub.s32 %s21, %s28
      %p287 = scmp.eq.s32.totalorder %s286, 0
      %s289 = sadd.s32 %s288, 1
      %s290 = scalar_select %p287, %s288, %s289
      %p293 = pneg %p287
      %p294 = scmp.eq.s32.totalorder %s21, 1
      %p295 = por %p293, %p294
      %p296 = scmp.ne.s32.totalorder %s288, %s291
      %p297 = scmp.eq.s32.totalorder %s21, 0
      %p298 = por %p296, %p297
      %p299 = scmp.ne.s32.totalorder %s288, %s291
      %p300 = scmp.eq.s32.totalorder %s26, 1
      %p301 = por %p299, %p300
      %p302 = scmp.ne.s32.totalorder %s291, %s292
      %p303 = scmp.eq.s32.totalorder %s26, 0
      %p304 = por %p302, %p303
      %p305 = scmp.ne.s32.totalorder %s291, %s292
      %p306 = scmp.eq.s32.totalorder %s27, 1
      %p307 = por %p305, %p306
      %p309 = scmp.ne.s32.totalorder %s292, %s308
      %p310 = scmp.eq.s32.totalorder %s27, 0
      %p311 = por %p309, %p310
      %p312 = scmp.le.s32.totalorder 1, %s21
      %p313 = scmp.lt.s32.totalorder %s21, 3
      %p314 = pnand %p312, %p313
      %p315 = pneg %p314
      // Predicated region
      $region9: #{tpu_custom_call.1} parent=5 // pred_check
        _
      $region10: #{tpu_custom_call.1} parent=5 // pred_check_branch
        %317 = sbr.rel (%p314) target = $region12
      $region11: #{tpu_custom_call.1} parent=5 // pred_region
        %s318 = ssub.s32 %s21, 1
        // Predicated region
        $region13: #{tpu_custom_call.1} parent=11 // pred_check
          %p319 = pneg %p68
        $region14: #{tpu_custom_call.1} parent=11 // pred_check_branch
          %321 = sbr.rel (%p319) target = $region16
        $region15: #{tpu_custom_call.1} parent=11 // pred_region
          _
        $region16: #{tpu_custom_call.1} parent=11 // pred_fallthru
          _
        // Predicated region
        $region17: #{tpu_custom_call.1} parent=11 // pred_check
          %p322 = pneg %p89
        $region18: #{tpu_custom_call.1} parent=11 // pred_check_branch
          %324 = sbr.rel (%p322) target = $region20
        $region19: #{tpu_custom_call.1} parent=11 // pred_region
          _
        $region20: #{tpu_custom_call.1} parent=11 // pred_fallthru
          _
        // Predicated region
        $region21: #{tpu_custom_call.1} parent=11 // pred_check
          %p325 = pneg %p110
        $region22: #{tpu_custom_call.1} parent=11 // pred_check_branch
          %327 = sbr.rel (%p325) target = $region24
        $region23: #{tpu_custom_call.1} parent=11 // pred_region
          _
        $region24: #{tpu_custom_call.1} parent=11 // pred_fallthru
          _
        // Predicated region
        $region25: #{tpu_custom_call.1} parent=11 // pred_check
          %p328 = pneg %p131
        $region26: #{tpu_custom_call.1} parent=11 // pred_check_branch
          %330 = sbr.rel (%p328) target = $region28
        $region27: #{tpu_custom_call.1} parent=11 // pred_region
          _
        $region28: #{tpu_custom_call.1} parent=11 // pred_fallthru
          _
        // Predicated region
        $region29: #{tpu_custom_call.1} parent=11 // pred_check
          %p331 = pneg %p152
        $region30: #{tpu_custom_call.1} parent=11 // pred_check_branch
          %333 = sbr.rel (%p331) target = $region32
        $region31: #{tpu_custom_call.1} parent=11 // pred_region
          _
        $region32: #{tpu_custom_call.1} parent=11 // pred_fallthru
          _
        // Predicated region
        $region33: #{tpu_custom_call.1} parent=11 // pred_check
          %p334 = pneg %p173
        $region34: #{tpu_custom_call.1} parent=11 // pred_check_branch
          %336 = sbr.rel (%p334) target = $region36
        $region35: #{tpu_custom_call.1} parent=11 // pred_region
          _
        $region36: #{tpu_custom_call.1} parent=11 // pred_fallthru
          _
        // Predicated region
        $region37: #{tpu_custom_call.1} parent=11 // pred_check
          %p337 = pneg %p194
        $region38: #{tpu_custom_call.1} parent=11 // pred_check_branch
          %339 = sbr.rel (%p337) target = $region40
        $region39: #{tpu_custom_call.1} parent=11 // pred_region
          _
        $region40: #{tpu_custom_call.1} parent=11 // pred_fallthru
          _
        // Predicated region
        $region41: #{tpu_custom_call.1} parent=11 // pred_check
          %p340 = pneg %p215
        $region42: #{tpu_custom_call.1} parent=11 // pred_check_branch
          %342 = sbr.rel (%p340) target = $region44
        $region43: #{tpu_custom_call.1} parent=11 // pred_region
          _
        $region44: #{tpu_custom_call.1} parent=11 // pred_fallthru
          _
        // Predicated region
        $region45: #{tpu_custom_call.1} parent=11 // pred_check
          %p343 = pneg %p236
        $region46: #{tpu_custom_call.1} parent=11 // pred_check_branch
          %345 = sbr.rel (%p343) target = $region48
        $region47: #{tpu_custom_call.1} parent=11 // pred_region
          _
        $region48: #{tpu_custom_call.1} parent=11 // pred_fallthru
          _
        // Predicated region
        $region49: #{tpu_custom_call.1} parent=11 // pred_check
          %p346 = pneg %p257
        $region50: #{tpu_custom_call.1} parent=11 // pred_check_branch
          %348 = sbr.rel (%p346) target = $region52
        $region51: #{tpu_custom_call.1} parent=11 // pred_region
          _
        $region52: #{tpu_custom_call.1} parent=11 // pred_fallthru
          _
        // Predicated region
        $region53: #{tpu_custom_call.1} parent=11 // pred_check
          %p349 = pneg %p278
        $region54: #{tpu_custom_call.1} parent=11 // pred_check_branch
          %351 = sbr.rel (%p349) target = $region56
        $region55: #{tpu_custom_call.1} parent=11 // pred_region
          _
        $region56: #{tpu_custom_call.1} parent=11 // pred_fallthru
          _
      $region12: #{tpu_custom_call.1} parent=5 // pred_fallthru
        _
      %p352 = scmp.lt.s32.totalorder %s21, 2
      // Predicated region
      $region57: #{tpu_custom_call.1} parent=5 // pred_check
        %p353 = pneg %p352
      $region58: #{tpu_custom_call.1} parent=5 // pred_check_branch
        %355 = sbr.rel (%p353) target = $region60
      $region59: #{tpu_custom_call.1} parent=5 // pred_region
        // Predicated region
        $region61: #{tpu_custom_call.1} parent=59 // pred_check
          %p356 = pneg %p41
        $region62: #{tpu_custom_call.1} parent=59 // pred_check_branch
          %358 = sbr.rel (%p356) target = $region64
        $region63: #{tpu_custom_call.1} parent=59 // pred_region
          %p359 = scmp.lt.s32.totalorder %s21, 1
          %s360 = scalar_select %p359, %s21, 1
          %s361 = smul.addr %s360, 8
          %s362 = scalar_lea.vmem %s0, %s361
        $region64: #{tpu_custom_call.1} parent=59 // pred_fallthru
          _
      $region60: #{tpu_custom_call.1} parent=5 // pred_fallthru
        _
      %p363 = scmp.le.s32.totalorder 1, %s21
      %p364 = scmp.lt.s32.totalorder %s21, 3
      %p365 = pnand %p363, %p364
      %p366 = pneg %p365
      // Predicated region
      $region65: #{tpu_custom_call.1} parent=5 // pred_check
        _
      $region66: #{tpu_custom_call.1} parent=5 // pred_check_branch
        %368 = sbr.rel (%p365) target = $region68
      $region67: #{tpu_custom_call.1} parent=5 // pred_region
        %s369 = ssub.s32 %s21, 1
        %p370 = scmp.lt.s32.totalorder %s26, 1
        %s371 = scalar_select %p370, %s26, 1
        %s372 = smul.addr %s371, 8
        %s373 = scalar_lea.vmem %s0, %s372
        %p374 = pneg %p47
        %p375 = pneg %p44
        %p376 = pneg %p68
        %p377 = pneg %p65
        %p378 = pneg %p89
        %p379 = pneg %p86
        %p380 = pneg %p110
        %p381 = pneg %p107
        %p382 = pneg %p131
        %p383 = pneg %p128
        %p384 = pneg %p152
        %p385 = pneg %p149
        %p386 = pneg %p173
        %p387 = pneg %p170
        %p388 = pneg %p194
        %p389 = pneg %p191
        %p390 = pneg %p215
        %p391 = pneg %p212
        %p392 = pneg %p236
        %p393 = pneg %p233
        %p394 = pneg %p257
        %p395 = pneg %p254
        %p396 = pneg %p278
        %p397 = pneg %p275
        %p398 = pneg %p304
        %p399 = pneg %p301
        %s400 = sand.u32 %s291, 1
        %s401 = scalar_lea.sflag [#allocation3], %s400
        %s402 = sand.u32 %s291, 1
        %s403 = smul.addr %s402, 8
        %s404 = scalar_lea.vmem [#allocation2], %s403
        %p405 = scmp.lt.s32.totalorder %s26, 1
        %s406 = scalar_select %p405, %s26, 1
        %s407 = smul.addr %s406, 8
        %s408 = scalar_lea.vmem %s0, %s407
        %v410 = vld [vmem:[%s408] sm:$0xff]
        %v411 = vld [vmem:[%s1] sm:$0x1]
        %v412 = vld [vmem:[%s2] sm:$0x1]
        %vm413 = vcmask 261120
        %v414 = vsel %vm413, %v410, 0.0
        %415 = vadd.xlane.f32.xlu0 %v414
        %v416 = vpop.xlane.xlu0 %415
        %v417 = vrcp.pop 32.0
        %v418 = vmul.f32 32.0, %v417
        %v419 = vsub.f32 1.0, %v418
        %v420 = vmul.f32 %v417, %v419
        %v421 = vadd.f32 %v417, %v420
        %vm422 = vweird.f32 %v417
        %v423 = vsel %vm422, %v417, %v421
        %v424 = vmul.f32 %v416, %v423
        %v425 = vsub.f32 %v410, %v424
        %v426 = vmul.f32 %v425, %v425
        %v427 = vsel %vm413, %v426, 0.0
        %428 = vadd.xlane.f32.xlu0 %v427
        %v429 = vpop.xlane.xlu0 %428
        %v430 = vmul.f32 %v429, %v423
        %v431 = vadd.f32 %v430, 1e-05
        %v432 = vrsqrt.pop %v431
        %v433 = vmul.f32 %v432, %v431
        %v434 = vmul.f32 %v433, %v432
        %v435 = vmul.f32 0.5, %v434
        %v436 = vsub.f32 1.5, %v435
        %v437 = vmul.f32 %v432, %v436
        %vm438 = vweird.f32 %v431
        %vm439 = vweird.f32 %v432
        %vm440 = vmor %vm438, %vm439
        %v441 = vsel %vm440, %v432, %v437
        %v442 = vmul.f32 %v425, %v441
        %v444 = vperm.slane %v411, 0
        %v446 = vmul.f32 %v442, %v444
        %v448 = vperm.slane %v412, 0
        %v450 = vadd.f32 %v446, %v448
        %v451 = vpack.c.bf16 %v450, %v450
        %v452 = vld [vmem:[%s3] sm:$0xf]
        %v453 = vld [vmem:[%s3 + $0x4] sm:$0xf]
        %v454 = vld [vmem:[%s3 + $0x8] sm:$0xf]
        %v455 = vld [vmem:[%s3 + $0xc] sm:$0xf]
        %v460 = vunpack.c.l.b16 %v452
        %v461 = vunpack.c.l.b16 %v453
        %v462 = vunpack.c.l.b16 %v454
        %v463 = vunpack.c.l.b16 %v455
        %v464 = vpack.c.b16 %v461, %v460
        %v465 = vpack.c.b16 %v463, %v462
        %v469 = vsel %vm413, %v451, 0
        %471 = vmatpush.bf16.msra.mxu0 0
        %472 = vmatpush.bf16.msra.mxu0 0
        %473 = vmatpush.bf16.msra.mxu0 0
        %474 = vmatpush.bf16.msra.mxu0 0
        %475 = vmatpush.bf16.msra.mxu0 0
        %476 = vmatpush.bf16.msra.mxu0 0
        %477 = vmatpush.bf16.msra.mxu0 %v465
        %478 = vmatpush.bf16.msra.mxu0 %v464
        %479 = vmatmul.bf16.gmra.mxu0 %v469
        %v480 = vpop.f32.mrf.mxu0
        %v481 = vadd.f32 0.0, %v480
        %v482 = vpop.f32.mrf.mxu0
        %483 = vdwg.mxu0
        %v484 = vmul.f32 %v481, 0.35355338
        %v485 = vpack.c.bf16 %v484, %v484
        %v486 = vpack.c.bf16 %v481, %v481
        %488 = vrot.lane.b32.xlu0 %v486, 96
        %v489 = vpop.permute.xlu0 %488
        %vm490 = vcmask 64512
        %v492 = vsel %vm490, %v485, 0
        %v495 = vsel %vm490, %v489, 0
        %497 = vmatpush.bf16.xpose.msra.mxu0 0
        %498 = vmatpush.bf16.xpose.msra.mxu0 0
        %499 = vmatpush.bf16.xpose.msra.mxu0 0
        %500 = vmatpush.bf16.xpose.msra.mxu0 0
        %501 = vmatpush.bf16.xpose.msra.mxu0 0
        %502 = vmatpush.bf16.xpose.msra.mxu0 0
        %503 = vmatpush.bf16.xpose.msra.mxu0 0
        %504 = vmatpush.bf16.xpose.msra.mxu0 %v495
        %505 = vmatmul.bf16.gmra.mxu0 %v492
        %v506 = vpop.f32.mrf.mxu0
        %v507 = vadd.f32 0.0, %v506
        %v508 = vpop.f32.mrf.mxu0
        %509 = vdwg.mxu0
        %v510 = vsel %vm490, %v507, -inf
        %511 = vmax.xlane.f32.xlu0 %v510
        %v512 = vpop.xlane.xlu0 %511
        %v513 = vsub.f32 %v507, %v512
        %v514 = vmul.f32 %v513, 1.442695
        %v515 = vpow.pop %v514
        %v516 = vsel %vm490, %v515, 0.0
        %517 = vadd.xlane.f32.xlu0 %v516
        %v518 = vpop.xlane.xlu0 %517
        %v519 = vpack.c.bf16 %v515, %v515
        %520 = vrot.lane.b32.xlu0 %v486, 64
        %v521 = vpop.permute.xlu0 %520
        %v523 = vsel %vm490, %v519, 0
        %vm525 = vcmask 1043456
        %v527 = vsel %vm525, %v521, 0
        %529 = vmatpush.bf16.msra.mxu0 0
        %530 = vmatpush.bf16.msra.mxu0 0
        %531 = vmatpush.bf16.msra.mxu0 0
        %532 = vmatpush.bf16.msra.mxu0 0
        %533 = vmatpush.bf16.msra.mxu0 0
        %534 = vmatpush.bf16.msra.mxu0 0
        %535 = vmatpush.bf16.msra.mxu0 0
        %536 = vmatpush.bf16.msra.mxu0 %v527
        %537 = vmatmul.bf16.gmra.mxu0 %v523
        %v538 = vpop.f32.mrf.mxu0
        %v539 = vadd.f32 0.0, %v538
        %v540 = vpop.f32.mrf.mxu0
        %541 = vdwg.mxu0
        %v542 = vrcp.pop %v518
        %v543 = vmul.f32 %v539, %v542
        %545 = vrot.lane.b32.xlu0 %v485, 120
        %v546 = vpop.permute.xlu0 %545
        %547 = vrot.lane.b32.xlu0 %v486, 88
        %v548 = vpop.permute.xlu0 %547
        %v550 = vsel %vm490, %v546, 0
        %v553 = vsel %vm490, %v548, 0
        %555 = vmatpush.bf16.xpose.msra.mxu0 0
        %556 = vmatpush.bf16.xpose.msra.mxu0 0
        %557 = vmatpush.bf16.xpose.msra.mxu0 0
        %558 = vmatpush.bf16.xpose.msra.mxu0 0
        %559 = vmatpush.bf16.xpose.msra.mxu0 0
        %560 = vmatpush.bf16.xpose.msra.mxu0 0
        %561 = vmatpush.bf16.xpose.msra.mxu0 0
        %562 = vmatpush.bf16.xpose.msra.mxu0 %v553
        %563 = vmatmul.bf16.gmra.mxu0 %v550
        %v564 = vpop.f32.mrf.mxu0
        %v565 = vadd.f32 0.0, %v564
        %v566 = vpop.f32.mrf.mxu0
        %567 = vdwg.mxu0
        %v568 = vsel %vm490, %v565, -inf
        %569 = vmax.xlane.f32.xlu0 %v568
        %v570 = vpop.xlane.xlu0 %569
        %v571 = vsub.f32 %v565, %v570
        %v572 = vmul.f32 %v571, 1.442695
        %v573 = vpow.pop %v572
        %v574 = vsel %vm490, %v573, 0.0
        %575 = vadd.xlane.f32.xlu0 %v574
        %v576 = vpop.xlane.xlu0 %575
        %v577 = vpack.c.bf16 %v573, %v573
        %578 = vrot.lane.b32.xlu0 %v486, 56
        %v579 = vpop.permute.xlu0 %578
        %v581 = vsel %vm490, %v577, 0
        %v584 = vsel %vm525, %v579, 0
        %586 = vmatpush.bf16.msra.mxu0 0
        %587 = vmatpush.bf16.msra.mxu0 0
        %588 = vmatpush.bf16.msra.mxu0 0
        %589 = vmatpush.bf16.msra.mxu0 0
        %590 = vmatpush.bf16.msra.mxu0 0
        %591 = vmatpush.bf16.msra.mxu0 0
        %592 = vmatpush.bf16.msra.mxu0 0
        %593 = vmatpush.bf16.msra.mxu0 %v584
        %594 = vmatmul.bf16.gmra.mxu0 %v581
        %v595 = vpop.f32.mrf.mxu0
        %v596 = vadd.f32 0.0, %v595
        %v597 = vpop.f32.mrf.mxu0
        %598 = vdwg.mxu0
        %v599 = vrcp.pop %v576
        %v600 = vmul.f32 %v596, %v599
        %601 = vrot.lane.b32.xlu0 %v485, 112
        %v602 = vpop.permute.xlu0 %601
        %603 = vrot.lane.b32.xlu0 %v486, 80
        %v604 = vpop.permute.xlu0 %603
        %v606 = vsel %vm490, %v602, 0
        %v609 = vsel %vm490, %v604, 0
        %611 = vmatpush.bf16.xpose.msra.mxu0 0
        %612 = vmatpush.bf16.xpose.msra.mxu0 0
        %613 = vmatpush.bf16.xpose.msra.mxu0 0
        %614 = vmatpush.bf16.xpose.msra.mxu0 0
        %615 = vmatpush.bf16.xpose.msra.mxu0 0
        %616 = vmatpush.bf16.xpose.msra.mxu0 0
        %617 = vmatpush.bf16.xpose.msra.mxu0 0
        %618 = vmatpush.bf16.xpose.msra.mxu0 %v609
        %619 = vmatmul.bf16.gmra.mxu0 %v606
        %v620 = vpop.f32.mrf.mxu0
        %v621 = vadd.f32 0.0, %v620
        %v622 = vpop.f32.mrf.mxu0
        %623 = vdwg.mxu0
        %v624 = vsel %vm490, %v621, -inf
        %625 = vmax.xlane.f32.xlu0 %v624
        %v626 = vpop.xlane.xlu0 %625
        %v627 = vsub.f32 %v621, %v626
        %v628 = vmul.f32 %v627, 1.442695
        %v629 = vpow.pop %v628
        %v630 = vsel %vm490, %v629, 0.0
        %631 = vadd.xlane.f32.xlu0 %v630
        %v632 = vpop.xlane.xlu0 %631
        %v633 = vpack.c.bf16 %v629, %v629
        %634 = vrot.lane.b32.xlu0 %v486, 48
        %v635 = vpop.permute.xlu0 %634
        %v637 = vsel %vm490, %v633, 0
        %v640 = vsel %vm525, %v635, 0
        %642 = vmatpush.bf16.msra.mxu0 0
        %643 = vmatpush.bf16.msra.mxu0 0
        %644 = vmatpush.bf16.msra.mxu0 0
        %645 = vmatpush.bf16.msra.mxu0 0
        %646 = vmatpush.bf16.msra.mxu0 0
        %647 = vmatpush.bf16.msra.mxu0 0
        %648 = vmatpush.bf16.msra.mxu0 0
        %649 = vmatpush.bf16.msra.mxu0 %v640
        %650 = vmatmul.bf16.gmra.mxu0 %v637
        %v651 = vpop.f32.mrf.mxu0
        %v652 = vadd.f32 0.0, %v651
        %v653 = vpop.f32.mrf.mxu0
        %654 = vdwg.mxu0
        %v655 = vrcp.pop %v632
        %v656 = vmul.f32 %v652, %v655
        %657 = vrot.lane.b32.xlu0 %v485, 104
        %v658 = vpop.permute.xlu0 %657
        %659 = vrot.lane.b32.xlu0 %v486, 72
        %v660 = vpop.permute.xlu0 %659
        %v662 = vsel %vm490, %v658, 0
        %v665 = vsel %vm490, %v660, 0
        %667 = vmatpush.bf16.xpose.msra.mxu0 0
        %668 = vmatpush.bf16.xpose.msra.mxu0 0
        %669 = vmatpush.bf16.xpose.msra.mxu0 0
        %670 = vmatpush.bf16.xpose.msra.mxu0 0
        %671 = vmatpush.bf16.xpose.msra.mxu0 0
        %672 = vmatpush.bf16.xpose.msra.mxu0 0
        %673 = vmatpush.bf16.xpose.msra.mxu0 0
        %674 = vmatpush.bf16.xpose.msra.mxu0 %v665
        %675 = vmatmul.bf16.gmra.mxu0 %v662
        %v676 = vpop.f32.mrf.mxu0
        %v677 = vadd.f32 0.0, %v676
        %v678 = vpop.f32.mrf.mxu0
        %679 = vdwg.mxu0
        %v680 = vsel %vm490, %v677, -inf
        %681 = vmax.xlane.f32.xlu0 %v680
        %v682 = vpop.xlane.xlu0 %681
        %v683 = vsub.f32 %v677, %v682
        %v684 = vmul.f32 %v683, 1.442695
        %v685 = vpow.pop %v684
        %v686 = vsel %vm490, %v685, 0.0
        %687 = vadd.xlane.f32.xlu0 %v686
        %v688 = vpop.xlane.xlu0 %687
        %v689 = vpack.c.bf16 %v685, %v685
        %690 = vrot.lane.b32.xlu0 %v486, 40
        %v691 = vpop.permute.xlu0 %690
        %v693 = vsel %vm490, %v689, 0
        %v696 = vsel %vm525, %v691, 0
        %698 = vmatpush.bf16.msra.mxu0 0
        %699 = vmatpush.bf16.msra.mxu0 0
        %700 = vmatpush.bf16.msra.mxu0 0
        %701 = vmatpush.bf16.msra.mxu0 0
        %702 = vmatpush.bf16.msra.mxu0 0
        %703 = vmatpush.bf16.msra.mxu0 0
        %704 = vmatpush.bf16.msra.mxu0 0
        %705 = vmatpush.bf16.msra.mxu0 %v696
        %706 = vmatmul.bf16.gmra.mxu0 %v693
        %v707 = vpop.f32.mrf.mxu0
        %v708 = vadd.f32 0.0, %v707
        %v709 = vpop.f32.mrf.mxu0
        %710 = vdwg.mxu0
        %v711 = vrcp.pop %v688
        %v712 = vmul.f32 %v708, %v711
        %714 = vrot.lane.b32.xlu0 %v600, 8
        %v715 = vpop.permute.xlu0 %714
        %718 = vrot.lane.b32.xlu0 %v656, 16
        %v719 = vpop.permute.xlu0 %718
        %722 = vrot.lane.b32.xlu0 %v712, 24
        %v723 = vpop.permute.xlu0 %722
        %v725 = vsel %vm490, %v543, %v715
        %vm726 = vcmask 130048
        %v727 = vsel %vm726, %v725, %v719
        %vm728 = vcmask 195584
        %v729 = vsel %vm728, %v727, %v723
        %v730 = vpack.c.bf16 %v729, %v729
        %v731 = vld [vmem:[%s4] sm:$0xf]
        %v732 = vld [vmem:[%s4 + $0x4] sm:$0xf]
        %v733 = vld [vmem:[%s4 + $0x8] sm:$0xf]
        %v734 = vld [vmem:[%s4 + $0xc] sm:$0xf]
        %v735 = vld [vmem:[%s5] sm:$0x1]
        %v737 = vperm.slane %v735, 0
        %v743 = vunpack.c.l.b16 %v731
        %v744 = vunpack.c.l.b16 %v732
        %v745 = vunpack.c.l.b16 %v733
        %v746 = vunpack.c.l.b16 %v734
        %v747 = vpack.c.b16 %v744, %v743
        %v748 = vpack.c.b16 %v746, %v745
        %v752 = vsel %vm413, %v730, 0
        %754 = vmatpush.bf16.msra.mxu0 0
        %755 = vmatpush.bf16.msra.mxu0 0
        %756 = vmatpush.bf16.msra.mxu0 0
        %757 = vmatpush.bf16.msra.mxu0 0
        %758 = vmatpush.bf16.msra.mxu0 0
        %759 = vmatpush.bf16.msra.mxu0 0
        %760 = vmatpush.bf16.msra.mxu0 %v748
        %761 = vmatpush.bf16.msra.mxu0 %v747
        %762 = vmatmul.bf16.gmra.mxu0 %v752
        %v763 = vpop.f32.mrf.mxu0
        %v764 = vadd.f32 %v737, %v763
        %v765 = vpop.f32.mrf.mxu0
        %766 = vdwg.mxu0
        %v767 = vadd.f32 %v410, %v764
        %v768 = vld [vmem:[%s6] sm:$0x1]
        %v769 = vld [vmem:[%s7] sm:$0x1]
        %v770 = vsel %vm413, %v767, 0.0
        %771 = vadd.xlane.f32.xlu0 %v770
        %v772 = vpop.xlane.xlu0 %771
        %v773 = vmul.f32 %v772, %v423
        %v774 = vsub.f32 %v767, %v773
        %v775 = vmul.f32 %v774, %v774
        %v776 = vsel %vm413, %v775, 0.0
        %777 = vadd.xlane.f32.xlu0 %v776
        %v778 = vpop.xlane.xlu0 %777
        %v779 = vmul.f32 %v778, %v423
        %v780 = vadd.f32 %v779, 1e-05
        %v781 = vrsqrt.pop %v780
        %v782 = vmul.f32 %v781, %v780
        %v783 = vmul.f32 %v782, %v781
        %v784 = vmul.f32 0.5, %v783
        %v785 = vsub.f32 1.5, %v784
        %v786 = vmul.f32 %v781, %v785
        %vm787 = vweird.f32 %v780
        %vm788 = vweird.f32 %v781
        %vm789 = vmor %vm787, %vm788
        %v790 = vsel %vm789, %v781, %v786
        %v791 = vmul.f32 %v774, %v790
        %v793 = vperm.slane %v768, 0
        %v795 = vmul.f32 %v791, %v793
        %v797 = vperm.slane %v769, 0
        %v799 = vadd.f32 %v795, %v797
        %v800 = vpack.c.bf16 %v799, %v799
        %v801 = vld [vmem:[%s8] sm:$0xf]
        %v802 = vld [vmem:[%s8 + $0x4] sm:$0xf]
        %v803 = vld [vmem:[%s8 + $0x8] sm:$0xf]
        %v804 = vld [vmem:[%s8 + $0xc] sm:$0xf]
        %v805 = vld [vmem:[%s9] sm:$0x1]
        %v807 = vperm.slane %v805, 0
        %v813 = vunpack.c.l.b16 %v801
        %v814 = vunpack.c.l.b16 %v802
        %v815 = vunpack.c.l.b16 %v803
        %v816 = vunpack.c.l.b16 %v804
        %v817 = vpack.c.b16 %v814, %v813
        %v818 = vpack.c.b16 %v816, %v815
        %v822 = vsel %vm413, %v800, 0
        %824 = vmatpush.bf16.msra.mxu0 0
        %825 = vmatpush.bf16.msra.mxu0 0
        %826 = vmatpush.bf16.msra.mxu0 0
        %827 = vmatpush.bf16.msra.mxu0 0
        %828 = vmatpush.bf16.msra.mxu0 0
        %829 = vmatpush.bf16.msra.mxu0 0
        %830 = vmatpush.bf16.msra.mxu0 %v818
        %831 = vmatpush.bf16.msra.mxu0 %v817
        %832 = vmatmul.bf16.gmra.mxu0 %v822
        %v833 = vpop.f32.mrf.mxu0
        %v834 = vadd.f32 %v807, %v833
        %v835 = vpop.f32.mrf.mxu0
        %836 = vdwg.mxu0
        %v837 = vmul.f32 %v834, 0.5
        %v838 = vmul.f32 %v834, 0.70710677
        %v839 = vmul.f32 %v838, %v838
        %v840 = vmin.f32 16.0, %v839
        %v841 = vmul.f32 %v840, 2.1237322e-06
        %v842 = vadd.f32 %v841, 0.00028619796
        %v843 = vmul.f32 %v840, %v842
        %v844 = vadd.f32 %v843, 0.0036580483
        %v845 = vmul.f32 %v840, %v844
        %v846 = vadd.f32 %v845, 0.05243302
        %v847 = vmul.f32 %v840, %v846
        %v848 = vadd.f32 %v847, 0.18741608
        %v849 = vmul.f32 %v840, %v848
        %v850 = vadd.f32 %v849, 1.1283791
        %v851 = vmul.f32 %v838, %v850
        %v852 = vmul.f32 %v840, 3.8918573e-05
        %v853 = vadd.f32 %v852, 0.001143296
        %v854 = vmul.f32 %v840, %v853
        %v855 = vadd.f32 %v854, 0.014752088
        %v856 = vmul.f32 %v840, %v855
        %v857 = vadd.f32 %v856, 0.112945676
        %v858 = vmul.f32 %v840, %v857
        %v859 = vadd.f32 %v858, 0.4994258
        %v860 = vmul.f32 %v840, %v859
        %v861 = vadd.f32 %v860, 1.0
        %v862 = vrcp.pop %v861
        %v863 = vmul.f32 %v861, %v862
        %v864 = vsub.f32 1.0, %v863
        %v865 = vmul.f32 %v862, %v864
        %v866 = vadd.f32 %v862, %v865
        %vm867 = vweird.f32 %v861
        %vm868 = vweird.f32 %v862
        %vm869 = vmor %vm867, %vm868
        %v870 = vsel %vm869, %v862, %v866
        %v871 = vand.u32 2147483647, %v861
        %vm872 = vcmp.eq.f32.partialorder %v871, 8.507059e+37
        %v873 = vand.u32 %v861, 2147483648
        %v874 = vor.u32 1.1754944e-38, %v873
        %v875 = vsel %vm872, %v874, %v870
        %v876 = vmul.f32 %v851, %v875
        %v877 = vmin.f32 %v876, 1.0
        %v878 = vmax.f32 %v877, -1.0
        %v879 = vadd.f32 %v878, 1.0
        %v880 = vmul.f32 %v837, %v879
        %v881 = vpack.c.bf16 %v880, %v880
        %v882 = vld [vmem:[%s10] sm:$0xf]
        %v883 = vld [vmem:[%s10 + $0x4] sm:$0xf]
        %v884 = vld [vmem:[%s10 + $0x8] sm:$0xf]
        %v885 = vld [vmem:[%s10 + $0xc] sm:$0xf]
        %v886 = vld [vmem:[%s10 + $0x10] sm:$0xf]
        %v887 = vld [vmem:[%s10 + $0x14] sm:$0xf]
        %v888 = vld [vmem:[%s10 + $0x18] sm:$0xf]
        %v889 = vld [vmem:[%s10 + $0x1c] sm:$0xf]
        %v890 = vld [vmem:[%s10 + $0x20] sm:$0xf]
        %v891 = vld [vmem:[%s10 + $0x24] sm:$0xf]
        %v892 = vld [vmem:[%s10 + $0x28] sm:$0xf]
        %v893 = vld [vmem:[%s10 + $0x2c] sm:$0xf]
        %v894 = vld [vmem:[%s10 + $0x30] sm:$0xf]
        %v895 = vld [vmem:[%s10 + $0x34] sm:$0xf]
        %v896 = vld [vmem:[%s10 + $0x38] sm:$0xf]
        %v897 = vld [vmem:[%s10 + $0x3c] sm:$0xf]
        %v898 = vld [vmem:[%s11] sm:$0x1]
        %v900 = vperm.slane %v898, 0
        %v918 = vunpack.c.l.b16 %v882
        %v919 = vunpack.c.l.b16 %v883
        %v920 = vunpack.c.l.b16 %v884
        %v921 = vunpack.c.l.b16 %v885
        %v922 = vunpack.c.l.b16 %v886
        %v923 = vunpack.c.l.b16 %v887
        %v924 = vunpack.c.l.b16 %v888
        %v925 = vunpack.c.l.b16 %v889
        %v926 = vunpack.c.l.b16 %v890
        %v927 = vunpack.c.l.b16 %v891
        %v928 = vunpack.c.l.b16 %v892
        %v929 = vunpack.c.l.b16 %v893
        %v930 = vunpack.c.l.b16 %v894
        %v931 = vunpack.c.l.b16 %v895
        %v932 = vunpack.c.l.b16 %v896
        %v933 = vunpack.c.l.b16 %v897
        %v934 = vpack.c.b16 %v919, %v918
        %v935 = vpack.c.b16 %v921, %v920
        %v936 = vpack.c.b16 %v923, %v922
        %v937 = vpack.c.b16 %v925, %v924
        %v938 = vpack.c.b16 %v927, %v926
        %v939 = vpack.c.b16 %v929, %v928
        %v940 = vpack.c.b16 %v931, %v930
        %v941 = vpack.c.b16 %v933, %v932
        %950 = vmatpush.bf16.msra.mxu0 %v941
        %951 = vmatpush.bf16.msra.mxu0 %v940
        %952 = vmatpush.bf16.msra.mxu0 %v939
        %953 = vmatpush.bf16.msra.mxu0 %v938
        %954 = vmatpush.bf16.msra.mxu0 %v937
        %955 = vmatpush.bf16.msra.mxu0 %v936
        %956 = vmatpush.bf16.msra.mxu0 %v935
        %957 = vmatpush.bf16.msra.mxu0 %v934
        %958 = vmatmul.bf16.gmra.mxu0 %v881
        %v959 = vpop.f32.mrf.mxu0
        %v960 = vadd.f32 %v900, %v959
        %v961 = vpop.f32.mrf.mxu0
        %962 = vdwg.mxu0
        %v963 = vadd.f32 %v767, %v960
        %964 = vst.msk [vmem:[%s404] sm:$0xff] %vm413, %v963
        %s965 = sand.u32 %s291, 1
        %s966 = scalar_lea.sflag [#allocation3], %s965
        %s967 = sand.u32 %s291, 1
        %s968 = smul.addr %s967, 8
        %s969 = scalar_lea.vmem [#allocation2], %s968
        // Predicated region
        $region69: #{tpu_custom_call.1} parent=67 // pred_check
          %p970 = pneg %p301
        $region70: #{tpu_custom_call.1} parent=67 // pred_check_branch
          %972 = sbr.rel (%p970) target = $region72
        $region71: #{tpu_custom_call.1} parent=67 // pred_region
          %974 = vsyncadd %s966, 0
          %s975 = smul.addr %s26, 8
          %s976 = scalar_lea.hbm %s12, %s975
          %s978 = sshll.u32 %s969, 4
          %s979 = int_to_ptr.vmem [resolvable:$true] %s978
          %s980 = sshll.u32 %s976, 4
          %s981 = int_to_ptr.hbm [resolvable:$true] %s980
          %983 = dma.vmem_to_hbm [thread:$0]  %s979, 128, %s981, %s966
        $region72: #{tpu_custom_call.1} parent=67 // pred_fallthru
          _
      $region68: #{tpu_custom_call.1} parent=5 // pred_fallthru
        _
      %p984 = scmp.le.s32.totalorder 2, %s21
      // Predicated region
      $region73: #{tpu_custom_call.1} parent=5 // pred_check
        %p985 = pneg %p984
      $region74: #{tpu_custom_call.1} parent=5 // pred_check_branch
        %987 = sbr.rel (%p985) target = $region76
      $region75: #{tpu_custom_call.1} parent=5 // pred_region
        %s988 = ssub.s32 %s21, 2
        // Predicated region
        $region77: #{tpu_custom_call.1} parent=75 // pred_check
          %p989 = pneg %p307
        $region78: #{tpu_custom_call.1} parent=75 // pred_check_branch
          %991 = sbr.rel (%p989) target = $region80
        $region79: #{tpu_custom_call.1} parent=75 // pred_region
          %s992 = sand.u32 %s292, 1
          %s993 = scalar_lea.sflag [#allocation3], %s992
          %s994 = sand.u32 %s292, 1
          %s995 = smul.addr %s994, 8
          %s996 = scalar_lea.vmem [#allocation2], %s995
          %998 = dma.done %s993, 128
        $region80: #{tpu_custom_call.1} parent=75 // pred_fallthru
          _
      $region76: #{tpu_custom_call.1} parent=5 // pred_fallthru
        _
    $region6: #{tpu_custom_call.1} parent=1 // loop_footer
      %s25 = sadd.s32 1, %s21
    $region7: #{tpu_custom_call.1} parent=1 // loop_footer_branch
      %20 = sbr.rel target = $region3
    $region8: #{tpu_custom_call.1} parent=1 // loop_exit
      _
    %999 = vsyncpa [#allocation3], 1
    %s1000 = scalar_lea.sflag [#allocation3], 1
    %1001 = vsyncpa %s1000, 1

// kernel: tpu_custom_call.1
$region0: #{tpu_custom_call.1}
  #allocation0 [shape = 'u32[]', space=smem, size = 0x4, offset = 0x4, fixed_abs, tag = 'smem constant byte address 0x4 - core index']
  #allocation1 [shape = 'u32[72,128]{1,0:T(1,128)}', space=vmem, size = 0x9000, scoped, tag = 'internal scratch']
  %s0 = inlined_call_operand.vmem [shape: f32[2,8,32], index: 0, kind: input, shape index: {}]
  %s1 = inlined_call_operand.vmem [shape: f32[1,32], index: 1, kind: input, shape index: {}]
  %s2 = inlined_call_operand.vmem [shape: f32[1,32], index: 2, kind: input, shape index: {}]
  %s3 = inlined_call_operand.vmem [shape: bf16[32,96], index: 3, kind: input, shape index: {}]
  %s4 = inlined_call_operand.vmem [shape: bf16[32,32], index: 4, kind: input, shape index: {}]
  %s5 = inlined_call_operand.vmem [shape: f32[1,32], index: 5, kind: input, shape index: {}]
  %s6 = inlined_call_operand.vmem [shape: f32[1,32], index: 6, kind: input, shape index: {}]
  %s7 = inlined_call_operand.vmem [shape: f32[1,32], index: 7, kind: input, shape index: {}]
  %s8 = inlined_call_operand.vmem [shape: bf16[32,128], index: 8, kind: input, shape index: {}]
  %s9 = inlined_call_operand.vmem [shape: f32[1,128], index: 9, kind: input, shape index: {}]
  %s10 = inlined_call_operand.vmem [shape: bf16[128,32], index: 10, kind: input, shape index: {}]
  %s11 = inlined_call_operand.vmem [shape: f32[1,32], index: 11, kind: input, shape index: {}]
  %s12 = inlined_call_operand.hbm [shape: f32[2,8,32], index: 12, kind: output, shape index: {}]
  %s13 = sld [smem:[#allocation0]]
  $region81: #{tpu_custom_call.1} parent=0
    _
  %s15 = ssub.s32 1, %s13
  %s16 = scalar_select 0, %s15, %s13
  $region1: #{tpu_custom_call.1} parent=0
    #allocation2 [shape = 'u8[8192]{0}', space=vmem, size = 0x2000, scoped, tag = 'output window, operand 0']
    #allocation3 [shape = 's32[2]{0}', space=sflag, size = 0x8, scoped, tag = 'scoped memory for tpu_custom_call.1']
    %17 = vsyncpa [#allocation3], 0
    %s18 = scalar_lea.sflag [#allocation3], 1
    %19 = vsyncpa %s18, 0
    loop: start=0, step=1, limit=4
    $region2: #{tpu_custom_call.1} parent=1 // loop_pre_header
      _
    $region3: #{tpu_custom_call.1} parent=1 // loop_header
      %s21 = sphi 0, %s25
      %p22 = scmp.ge.s32.totalorder %s21, 4
      %s31 = sphi 0, %s33
      %s34 = sphi 0, %s31
      %s35 = sphi 0, %s34
      %s51 = sphi 0, %s35
      %s55 = sphi 0, %s55
      %s57 = sphi 0, %s55
      %s58 = sphi 0, %s57
      %s72 = sphi 0, %s58
      %s76 = sphi 0, %s76
      %s78 = sphi 0, %s76
      %s79 = sphi 0, %s78
      %s93 = sphi 0, %s79
      %s97 = sphi 0, %s97
      %s99 = sphi 0, %s97
      %s100 = sphi 0, %s99
      %s114 = sphi 0, %s100
      %s118 = sphi 0, %s118
      %s120 = sphi 0, %s118
      %s121 = sphi 0, %s120
      %s135 = sphi 0, %s121
      %s139 = sphi 0, %s139
      %s141 = sphi 0, %s139
      %s142 = sphi 0, %s141
      %s156 = sphi 0, %s142
      %s160 = sphi 0, %s160
      %s162 = sphi 0, %s160
      %s163 = sphi 0, %s162
      %s177 = sphi 0, %s163
      %s181 = sphi 0, %s181
      %s183 = sphi 0, %s181
      %s184 = sphi 0, %s183
      %s198 = sphi 0, %s184
      %s202 = sphi 0, %s202
      %s204 = sphi 0, %s202
      %s205 = sphi 0, %s204
      %s219 = sphi 0, %s205
      %s223 = sphi 0, %s223
      %s225 = sphi 0, %s223
      %s226 = sphi 0, %s225
      %s240 = sphi 0, %s226
      %s244 = sphi 0, %s244
      %s246 = sphi 0, %s244
      %s247 = sphi 0, %s246
      %s261 = sphi 0, %s247
      %s265 = sphi 0, %s265
      %s267 = sphi 0, %s265
      %s268 = sphi 0, %s267
      %s282 = sphi 0, %s268
      %s288 = sphi 0, %s290
      %s291 = sphi 0, %s288
      %s292 = sphi 0, %s291
      %s308 = sphi 0, %s292
    $region4: #{tpu_custom_call.1} parent=1 // loop_header_branch
      %24 = sbr.rel (%p22) target = $region8
    $region5: #{tpu_custom_call.1} parent=1 // loop_body
      %s26 = ssub.s32 %s21, 1
      %s27 = ssub.s32 %s21, 2
      %s28 = sadd.s32 %s21, 1
      %s29 = ssub.s32 %s21, %s28
      %p30 = scmp.eq.s32.totalorder %s29, 0
      %s32 = sadd.s32 %s31, 1
      %s33 = scalar_select %p30, %s31, %s32
      %p36 = pneg %p30
      %p37 = scmp.eq.s32.totalorder %s21, 1
      %p38 = por %p36, %p37
      %p39 = scmp.ne.s32.totalorder %s31, %s34
      %p40 = scmp.eq.s32.totalorder %s21, 0
      %p41 = por %p39, %p40
      %p42 = scmp.ne.s32.totalorder %s31, %s34
      %p43 = scmp.eq.s32.totalorder %s26, 1
      %p44 = por %p42, %p43
      %p45 = scmp.ne.s32.totalorder %s34, %s35
      %p46 = scmp.eq.s32.totalorder %s26, 0
      %p47 = por %p45, %p46
      %p48 = scmp.ne.s32.totalorder %s34, %s35
      %p49 = scmp.eq.s32.totalorder %s27, 1
      %p50 = por %p48, %p49
      %p52 = scmp.ne.s32.totalorder %s35, %s51
      %p53 = scmp.eq.s32.totalorder %s27, 0
      %p54 = por %p52, %p53
      %s56 = sadd.s32 %s55, 1
      %p59 = scmp.eq.s32.totalorder %s21, 1
      %p60 = scmp.ne.s32.totalorder %s55, %s57
      %p61 = scmp.eq.s32.totalorder %s21, 0
      %p62 = por %p60, %p61
      %p63 = scmp.ne.s32.totalorder %s55, %s57
      %p64 = scmp.eq.s32.totalorder %s26, 1
      %p65 = por %p63, %p64
      %p66 = scmp.ne.s32.totalorder %s57, %s58
      %p67 = scmp.eq.s32.totalorder %s26, 0
      %p68 = por %p66, %p67
      %p69 = scmp.ne.s32.totalorder %s57, %s58
      %p70 = scmp.eq.s32.totalorder %s27, 1
      %p71 = por %p69, %p70
      %p73 = scmp.ne.s32.totalorder %s58, %s72
      %p74 = scmp.eq.s32.totalorder %s27, 0
      %p75 = por %p73, %p74
      %s77 = sadd.s32 %s76, 1
      %p80 = scmp.eq.s32.totalorder %s21, 1
      %p81 = scmp.ne.s32.totalorder %s76, %s78
      %p82 = scmp.eq.s32.totalorder %s21, 0
      %p83 = por %p81, %p82
      %p84 = scmp.ne.s32.totalorder %s76, %s78
      %p85 = scmp.eq.s32.totalorder %s26, 1
      %p86 = por %p84, %p85
      %p87 = scmp.ne.s32.totalorder %s78, %s79
      %p88 = scmp.eq.s32.totalorder %s26, 0
      %p89 = por %p87, %p88
      %p90 = scmp.ne.s32.totalorder %s78, %s79
      %p91 = scmp.eq.s32.totalorder %s27, 1
      %p92 = por %p90, %p91
      %p94 = scmp.ne.s32.totalorder %s79, %s93
      %p95 = scmp.eq.s32.totalorder %s27, 0
      %p96 = por %p94, %p95
      %s98 = sadd.s32 %s97, 1
      %p101 = scmp.eq.s32.totalorder %s21, 1
      %p102 = scmp.ne.s32.totalorder %s97, %s99
      %p103 = scmp.eq.s32.totalorder %s21, 0
      %p104 = por %p102, %p103
      %p105 = scmp.ne.s32.totalorder %s97, %s99
      %p106 = scmp.eq.s32.totalorder %s26, 1
      %p107 = por %p105, %p106
      %p108 = scmp.ne.s32.totalorder %s99, %s100
      %p109 = scmp.eq.s32.totalorder %s26, 0
      %p110 = por %p108, %p109
      %p111 = scmp.ne.s32.totalorder %s99, %s100
      %p112 = scmp.eq.s32.totalorder %s27, 1
      %p113 = por %p111, %p112
      %p115 = scmp.ne.s32.totalorder %s100, %s114
      %p116 = scmp.eq.s32.totalorder %s27, 0
      %p117 = por %p115, %p116
      %s119 = sadd.s32 %s118, 1
      %p122 = scmp.eq.s32.totalorder %s21, 1
      %p123 = scmp.ne.s32.totalorder %s118, %s120
      %p124 = scmp.eq.s32.totalorder %s21, 0
      %p125 = por %p123, %p124
      %p126 = scmp.ne.s32.totalorder %s118, %s120
      %p127 = scmp.eq.s32.totalorder %s26, 1
      %p128 = por %p126, %p127
      %p129 = scmp.ne.s32.totalorder %s120, %s121
      %p130 = scmp.eq.s32.totalorder %s26, 0
      %p131 = por %p129, %p130
      %p132 = scmp.ne.s32.totalorder %s120, %s121
      %p133 = scmp.eq.s32.totalorder %s27, 1
      %p134 = por %p132, %p133
      %p136 = scmp.ne.s32.totalorder %s121, %s135
      %p137 = scmp.eq.s32.totalorder %s27, 0
      %p138 = por %p136, %p137
      %s140 = sadd.s32 %s139, 1
      %p143 = scmp.eq.s32.totalorder %s21, 1
      %p144 = scmp.ne.s32.totalorder %s139, %s141
      %p145 = scmp.eq.s32.totalorder %s21, 0
      %p146 = por %p144, %p145
      %p147 = scmp.ne.s32.totalorder %s139, %s141
      %p148 = scmp.eq.s32.totalorder %s26, 1
      %p149 = por %p147, %p148
      %p150 = scmp.ne.s32.totalorder %s141, %s142
      %p151 = scmp.eq.s32.totalorder %s26, 0
      %p152 = por %p150, %p151
      %p153 = scmp.ne.s32.totalorder %s141, %s142
      %p154 = scmp.eq.s32.totalorder %s27, 1
      %p155 = por %p153, %p154
      %p157 = scmp.ne.s32.totalorder %s142, %s156
      %p158 = scmp.eq.s32.totalorder %s27, 0
      %p159 = por %p157, %p158
      %s161 = sadd.s32 %s160, 1
      %p164 = scmp.eq.s32.totalorder %s21, 1
      %p165 = scmp.ne.s32.totalorder %s160, %s162
      %p166 = scmp.eq.s32.totalorder %s21, 0
      %p167 = por %p165, %p166
      %p168 = scmp.ne.s32.totalorder %s160, %s162
      %p169 = scmp.eq.s32.totalorder %s26, 1
      %p170 = por %p168, %p169
      %p171 = scmp.ne.s32.totalorder %s162, %s163
      %p172 = scmp.eq.s32.totalorder %s26, 0
      %p173 = por %p171, %p172
      %p174 = scmp.ne.s32.totalorder %s162, %s163
      %p175 = scmp.eq.s32.totalorder %s27, 1
      %p176 = por %p174, %p175
      %p178 = scmp.ne.s32.totalorder %s163, %s177
      %p179 = scmp.eq.s32.totalorder %s27, 0
      %p180 = por %p178, %p179
      %s182 = sadd.s32 %s181, 1
      %p185 = scmp.eq.s32.totalorder %s21, 1
      %p186 = scmp.ne.s32.totalorder %s181, %s183
      %p187 = scmp.eq.s32.totalorder %s21, 0
      %p188 = por %p186, %p187
      %p189 = scmp.ne.s32.totalorder %s181, %s183
      %p190 = scmp.eq.s32.totalorder %s26, 1
      %p191 = por %p189, %p190
      %p192 = scmp.ne.s32.totalorder %s183, %s184
      %p193 = scmp.eq.s32.totalorder %s26, 0
      %p194 = por %p192, %p193
      %p195 = scmp.ne.s32.totalorder %s183, %s184
      %p196 = scmp.eq.s32.totalorder %s27, 1
      %p197 = por %p195, %p196
      %p199 = scmp.ne.s32.totalorder %s184, %s198
      %p200 = scmp.eq.s32.totalorder %s27, 0
      %p201 = por %p199, %p200
      %s203 = sadd.s32 %s202, 1
      %p206 = scmp.eq.s32.totalorder %s21, 1
      %p207 = scmp.ne.s32.totalorder %s202, %s204
      %p208 = scmp.eq.s32.totalorder %s21, 0
      %p209 = por %p207, %p208
      %p210 = scmp.ne.s32.totalorder %s202, %s204
      %p211 = scmp.eq.s32.totalorder %s26, 1
      %p212 = por %p210, %p211
      %p213 = scmp.ne.s32.totalorder %s204, %s205
      %p214 = scmp.eq.s32.totalorder %s26, 0
      %p215 = por %p213, %p214
      %p216 = scmp.ne.s32.totalorder %s204, %s205
      %p217 = scmp.eq.s32.totalorder %s27, 1
      %p218 = por %p216, %p217
      %p220 = scmp.ne.s32.totalorder %s205, %s219
      %p221 = scmp.eq.s32.totalorder %s27, 0
      %p222 = por %p220, %p221
      %s224 = sadd.s32 %s223, 1
      %p227 = scmp.eq.s32.totalorder %s21, 1
      %p228 = scmp.ne.s32.totalorder %s223, %s225
      %p229 = scmp.eq.s32.totalorder %s21, 0
      %p230 = por %p228, %p229
      %p231 = scmp.ne.s32.totalorder %s223, %s225
      %p232 = scmp.eq.s32.totalorder %s26, 1
      %p233 = por %p231, %p232
      %p234 = scmp.ne.s32.totalorder %s225, %s226
      %p235 = scmp.eq.s32.totalorder %s26, 0
      %p236 = por %p234, %p235
      %p237 = scmp.ne.s32.totalorder %s225, %s226
      %p238 = scmp.eq.s32.totalorder %s27, 1
      %p239 = por %p237, %p238
      %p241 = scmp.ne.s32.totalorder %s226, %s240
      %p242 = scmp.eq.s32.totalorder %s27, 0
      %p243 = por %p241, %p242
      %s245 = sadd.s32 %s244, 1
      %p248 = scmp.eq.s32.totalorder %s21, 1
      %p249 = scmp.ne.s32.totalorder %s244, %s246
      %p250 = scmp.eq.s32.totalorder %s21, 0
      %p251 = por %p249, %p250
      %p252 = scmp.ne.s32.totalorder %s244, %s246
      %p253 = scmp.eq.s32.totalorder %s26, 1
      %p254 = por %p252, %p253
      %p255 = scmp.ne.s32.totalorder %s246, %s247
      %p256 = scmp.eq.s32.totalorder %s26, 0
      %p257 = por %p255, %p256
      %p258 = scmp.ne.s32.totalorder %s246, %s247
      %p259 = scmp.eq.s32.totalorder %s27, 1
      %p260 = por %p258, %p259
      %p262 = scmp.ne.s32.totalorder %s247, %s261
      %p263 = scmp.eq.s32.totalorder %s27, 0
      %p264 = por %p262, %p263
      %s266 = sadd.s32 %s265, 1
      %p269 = scmp.eq.s32.totalorder %s21, 1
      %p270 = scmp.ne.s32.totalorder %s265, %s267
      %p271 = scmp.eq.s32.totalorder %s21, 0
      %p272 = por %p270, %p271
      %p273 = scmp.ne.s32.totalorder %s265, %s267
      %p274 = scmp.eq.s32.totalorder %s26, 1
      %p275 = por %p273, %p274
      %p276 = scmp.ne.s32.totalorder %s267, %s268
      %p277 = scmp.eq.s32.totalorder %s26, 0
      %p278 = por %p276, %p277
      %p279 = scmp.ne.s32.totalorder %s267, %s268
      %p280 = scmp.eq.s32.totalorder %s27, 1
      %p281 = por %p279, %p280
      %p283 = scmp.ne.s32.totalorder %s268, %s282
      %p284 = scmp.eq.s32.totalorder %s27, 0
      %p285 = por %p283, %p284
      %s286 = ssub.s32 %s21, %s28
      %p287 = scmp.eq.s32.totalorder %s286, 0
      %s289 = sadd.s32 %s288, 1
      %s290 = scalar_select %p287, %s288, %s289
      %p293 = pneg %p287
      %p294 = scmp.eq.s32.totalorder %s21, 1
      %p295 = por %p293, %p294
      %p296 = scmp.ne.s32.totalorder %s288, %s291
      %p297 = scmp.eq.s32.totalorder %s21, 0
      %p298 = por %p296, %p297
      %p299 = scmp.ne.s32.totalorder %s288, %s291
      %p300 = scmp.eq.s32.totalorder %s26, 1
      %p301 = por %p299, %p300
      %p302 = scmp.ne.s32.totalorder %s291, %s292
      %p303 = scmp.eq.s32.totalorder %s26, 0
      %p304 = por %p302, %p303
      %p305 = scmp.ne.s32.totalorder %s291, %s292
      %p306 = scmp.eq.s32.totalorder %s27, 1
      %p307 = por %p305, %p306
      %p309 = scmp.ne.s32.totalorder %s292, %s308
      %p310 = scmp.eq.s32.totalorder %s27, 0
      %p311 = por %p309, %p310
      %p312 = scmp.le.s32.totalorder 1, %s21
      %p313 = scmp.lt.s32.totalorder %s21, 3
      %p314 = pnand %p312, %p313
      %p315 = pneg %p314
      // Predicated region
      $region9: #{tpu_custom_call.1} parent=5 // pred_check
        _
      $region10: #{tpu_custom_call.1} parent=5 // pred_check_branch
        %317 = sbr.rel (%p314) target = $region12
      $region11: #{tpu_custom_call.1} parent=5 // pred_region
        %s318 = ssub.s32 %s21, 1
        // Predicated region
        $region13: #{tpu_custom_call.1} parent=11 // pred_check
          %p319 = pneg %p68
        $region14: #{tpu_custom_call.1} parent=11 // pred_check_branch
          %321 = sbr.rel (%p319) target = $region16
        $region15: #{tpu_custom_call.1} parent=11 // pred_region
          _
        $region16: #{tpu_custom_call.1} parent=11 // pred_fallthru
          _
        // Predicated region
        $region17: #{tpu_custom_call.1} parent=11 // pred_check
          %p322 = pneg %p89
        $region18: #{tpu_custom_call.1} parent=11 // pred_check_branch
          %324 = sbr.rel (%p322) target = $region20
        $region19: #{tpu_custom_call.1} parent=11 // pred_region
          _
        $region20: #{tpu_custom_call.1} parent=11 // pred_fallthru
          _
        // Predicated region
        $region21: #{tpu_custom_call.1} parent=11 // pred_check
          %p325 = pneg %p110
        $region22: #{tpu_custom_call.1} parent=11 // pred_check_branch
          %327 = sbr.rel (%p325) target = $region24
        $region23: #{tpu_custom_call.1} parent=11 // pred_region
          _
        $region24: #{tpu_custom_call.1} parent=11 // pred_fallthru
          _
        // Predicated region
        $region25: #{tpu_custom_call.1} parent=11 // pred_check
          %p328 = pneg %p131
        $region26: #{tpu_custom_call.1} parent=11 // pred_check_branch
          %330 = sbr.rel (%p328) target = $region28
        $region27: #{tpu_custom_call.1} parent=11 // pred_region
          _
        $region28: #{tpu_custom_call.1} parent=11 // pred_fallthru
          _
        // Predicated region
        $region29: #{tpu_custom_call.1} parent=11 // pred_check
          %p331 = pneg %p152
        $region30: #{tpu_custom_call.1} parent=11 // pred_check_branch
          %333 = sbr.rel (%p331) target = $region32
        $region31: #{tpu_custom_call.1} parent=11 // pred_region
          _
        $region32: #{tpu_custom_call.1} parent=11 // pred_fallthru
          _
        // Predicated region
        $region33: #{tpu_custom_call.1} parent=11 // pred_check
          %p334 = pneg %p173
        $region34: #{tpu_custom_call.1} parent=11 // pred_check_branch
          %336 = sbr.rel (%p334) target = $region36
        $region35: #{tpu_custom_call.1} parent=11 // pred_region
          _
        $region36: #{tpu_custom_call.1} parent=11 // pred_fallthru
          _
        // Predicated region
        $region37: #{tpu_custom_call.1} parent=11 // pred_check
          %p337 = pneg %p194
        $region38: #{tpu_custom_call.1} parent=11 // pred_check_branch
          %339 = sbr.rel (%p337) target = $region40
        $region39: #{tpu_custom_call.1} parent=11 // pred_region
          _
        $region40: #{tpu_custom_call.1} parent=11 // pred_fallthru
          _
        // Predicated region
        $region41: #{tpu_custom_call.1} parent=11 // pred_check
          %p340 = pneg %p215
        $region42: #{tpu_custom_call.1} parent=11 // pred_check_branch
          %342 = sbr.rel (%p340) target = $region44
        $region43: #{tpu_custom_call.1} parent=11 // pred_region
          _
        $region44: #{tpu_custom_call.1} parent=11 // pred_fallthru
          _
        // Predicated region
        $region45: #{tpu_custom_call.1} parent=11 // pred_check
          %p343 = pneg %p236
        $region46: #{tpu_custom_call.1} parent=11 // pred_check_branch
          %345 = sbr.rel (%p343) target = $region48
        $region47: #{tpu_custom_call.1} parent=11 // pred_region
          _
        $region48: #{tpu_custom_call.1} parent=11 // pred_fallthru
          _
        // Predicated region
        $region49: #{tpu_custom_call.1} parent=11 // pred_check
          %p346 = pneg %p257
        $region50: #{tpu_custom_call.1} parent=11 // pred_check_branch
          %348 = sbr.rel (%p346) target = $region52
        $region51: #{tpu_custom_call.1} parent=11 // pred_region
          _
        $region52: #{tpu_custom_call.1} parent=11 // pred_fallthru
          _
        // Predicated region
        $region53: #{tpu_custom_call.1} parent=11 // pred_check
          %p349 = pneg %p278
        $region54: #{tpu_custom_call.1} parent=11 // pred_check_branch
          %351 = sbr.rel (%p349) target = $region56
        $region55: #{tpu_custom_call.1} parent=11 // pred_region
          _
        $region56: #{tpu_custom_call.1} parent=11 // pred_fallthru
          _
      $region12: #{tpu_custom_call.1} parent=5 // pred_fallthru
        _
      %p352 = scmp.lt.s32.totalorder %s21, 2
      // Predicated region
      $region57: #{tpu_custom_call.1} parent=5 // pred_check
        %p353 = pneg %p352
      $region58: #{tpu_custom_call.1} parent=5 // pred_check_branch
        %355 = sbr.rel (%p353) target = $region60
      $region59: #{tpu_custom_call.1} parent=5 // pred_region
        // Predicated region
        $region61: #{tpu_custom_call.1} parent=59 // pred_check
          %p356 = pneg %p41
        $region62: #{tpu_custom_call.1} parent=59 // pred_check_branch
          %358 = sbr.rel (%p356) target = $region64
        $region63: #{tpu_custom_call.1} parent=59 // pred_region
          %p359 = scmp.lt.s32.totalorder %s21, 1
          %s360 = scalar_select %p359, %s21, 1
          %s361 = smul.addr %s360, 8
          %s362 = scalar_lea.vmem %s0, %s361
        $region64: #{tpu_custom_call.1} parent=59 // pred_fallthru
          _
      $region60: #{tpu_custom_call.1} parent=5 // pred_fallthru
        _
      %p363 = scmp.le.s32.totalorder 1, %s21
      %p364 = scmp.lt.s32.totalorder %s21, 3
      %p365 = pnand %p363, %p364
      %p366 = pneg %p365
      // Predicated region
      $region65: #{tpu_custom_call.1} parent=5 // pred_check
        _
      $region66: #{tpu_custom_call.1} parent=5 // pred_check_branch
        %368 = sbr.rel (%p365) target = $region68
      $region67: #{tpu_custom_call.1} parent=5 // pred_region
        %s369 = ssub.s32 %s21, 1
        %p370 = scmp.lt.s32.totalorder %s26, 1
        %s371 = scalar_select %p370, %s26, 1
        %s372 = smul.addr %s371, 8
        %s373 = scalar_lea.vmem %s0, %s372
        %p374 = pneg %p47
        %p375 = pneg %p44
        %p376 = pneg %p68
        %p377 = pneg %p65
        %p378 = pneg %p89
        %p379 = pneg %p86
        %p380 = pneg %p110
        %p381 = pneg %p107
        %p382 = pneg %p131
        %p383 = pneg %p128
        %p384 = pneg %p152
        %p385 = pneg %p149
        %p386 = pneg %p173
        %p387 = pneg %p170
        %p388 = pneg %p194
        %p389 = pneg %p191
        %p390 = pneg %p215
        %p391 = pneg %p212
        %p392 = pneg %p236
        %p393 = pneg %p233
        %p394 = pneg %p257
        %p395 = pneg %p254
        %p396 = pneg %p278
        %p397 = pneg %p275
        %p398 = pneg %p304
        %p399 = pneg %p301
        %s400 = sand.u32 %s291, 1
        %s401 = scalar_lea.sflag [#allocation3], %s400
        %s402 = sand.u32 %s291, 1
        %s403 = smul.addr %s402, 8
        %s404 = scalar_lea.vmem [#allocation2], %s403
        %p405 = scmp.lt.s32.totalorder %s26, 1
        %s406 = scalar_select %p405, %s26, 1
        %s407 = smul.addr %s406, 8
        %s408 = scalar_lea.vmem %s0, %s407
        %v410 = vld [vmem:[%s408] sm:$0xff]
        %v411 = vld [vmem:[%s1] sm:$0x1]
        %v412 = vld [vmem:[%s2] sm:$0x1]
        %vm413 = vcmask 261120
        %v414 = vsel %vm413, %v410, 0.0
        %415 = vadd.xlane.f32.xlu0 %v414
        %v416 = vpop.xlane.xlu0 %415
        %v417 = vrcp.pop 32.0
        %v418 = vmul.f32 32.0, %v417
        %v419 = vsub.f32 1.0, %v418
        %v420 = vmul.f32 %v417, %v419
        %v421 = vadd.f32 %v417, %v420
        %vm422 = vweird.f32 %v417
        %v423 = vsel %vm422, %v417, %v421
        %v424 = vmul.f32 %v416, %v423
        %v425 = vsub.f32 %v410, %v424
        %v426 = vmul.f32 %v425, %v425
        %v427 = vsel %vm413, %v426, 0.0
        %428 = vadd.xlane.f32.xlu0 %v427
        %v429 = vpop.xlane.xlu0 %428
        %v430 = vmul.f32 %v429, %v423
        %v431 = vadd.f32 %v430, 1e-05
        %v432 = vrsqrt.pop %v431
        %v433 = vmul.f32 %v432, %v431
        %v434 = vmul.f32 %v433, %v432
        %v435 = vmul.f32 0.5, %v434
        %v436 = vsub.f32 1.5, %v435
        %v437 = vmul.f32 %v432, %v436
        %vm438 = vweird.f32 %v431
        %vm439 = vweird.f32 %v432
        %vm440 = vmor %vm438, %vm439
        %v441 = vsel %vm440, %v432, %v437
        %v442 = vmul.f32 %v425, %v441
        %v444 = vperm.slane %v411, 0
        %v446 = vmul.f32 %v442, %v444
        %v448 = vperm.slane %v412, 0
        %v450 = vadd.f32 %v446, %v448
        %v451 = vpack.c.bf16 %v450, %v450
        %v452 = vld [vmem:[%s3] sm:$0xf]
        %v453 = vld [vmem:[%s3 + $0x4] sm:$0xf]
        %v454 = vld [vmem:[%s3 + $0x8] sm:$0xf]
        %v455 = vld [vmem:[%s3 + $0xc] sm:$0xf]
        %v460 = vunpack.c.l.b16 %v452
        %v461 = vunpack.c.l.b16 %v453
        %v462 = vunpack.c.l.b16 %v454
        %v463 = vunpack.c.l.b16 %v455
        %v464 = vpack.c.b16 %v461, %v460
        %v465 = vpack.c.b16 %v463, %v462
        %v469 = vsel %vm413, %v451, 0
        %471 = vmatpush.bf16.msra.mxu0 0
        %472 = vmatpush.bf16.msra.mxu0 0
        %473 = vmatpush.bf16.msra.mxu0 0
        %474 = vmatpush.bf16.msra.mxu0 0
        %475 = vmatpush.bf16.msra.mxu0 0
        %476 = vmatpush.bf16.msra.mxu0 0
        %477 = vmatpush.bf16.msra.mxu0 %v465
        %478 = vmatpush.bf16.msra.mxu0 %v464
        %479 = vmatmul.bf16.gmra.mxu0 %v469
        %v480 = vpop.f32.mrf.mxu0
        %v481 = vadd.f32 0.0, %v480
        %v482 = vpop.f32.mrf.mxu0
        %483 = vdwg.mxu0
        %v484 = vmul.f32 %v481, 0.35355338
        %v485 = vpack.c.bf16 %v484, %v484
        %v486 = vpack.c.bf16 %v481, %v481
        %488 = vrot.lane.b32.xlu0 %v486, 96
        %v489 = vpop.permute.xlu0 %488
        %vm490 = vcmask 64512
        %v492 = vsel %vm490, %v485, 0
        %v495 = vsel %vm490, %v489, 0
        %497 = vmatpush.bf16.xpose.msra.mxu0 0
        %498 = vmatpush.bf16.xpose.msra.mxu0 0
        %499 = vmatpush.bf16.xpose.msra.mxu0 0
        %500 = vmatpush.bf16.xpose.msra.mxu0 0
        %501 = vmatpush.bf16.xpose.msra.mxu0 0
        %502 = vmatpush.bf16.xpose.msra.mxu0 0
        %503 = vmatpush.bf16.xpose.msra.mxu0 0
        %504 = vmatpush.bf16.xpose.msra.mxu0 %v495
        %505 = vmatmul.bf16.gmra.mxu0 %v492
        %v506 = vpop.f32.mrf.mxu0
        %v507 = vadd.f32 0.0, %v506
        %v508 = vpop.f32.mrf.mxu0
        %509 = vdwg.mxu0
        %v510 = vsel %vm490, %v507, -inf
        %511 = vmax.xlane.f32.xlu0 %v510
        %v512 = vpop.xlane.xlu0 %511
        %v513 = vsub.f32 %v507, %v512
        %v514 = vmul.f32 %v513, 1.442695
        %v515 = vpow.pop %v514
        %v516 = vsel %vm490, %v515, 0.0
        %517 = vadd.xlane.f32.xlu0 %v516
        %v518 = vpop.xlane.xlu0 %517
        %v519 = vpack.c.bf16 %v515, %v515
        %520 = vrot.lane.b32.xlu0 %v486, 64
        %v521 = vpop.permute.xlu0 %520
        %v523 = vsel %vm490, %v519, 0
        %vm525 = vcmask 1043456
        %v527 = vsel %vm525, %v521, 0
        %529 = vmatpush.bf16.msra.mxu0 0
        %530 = vmatpush.bf16.msra.mxu0 0
        %531 = vmatpush.bf16.msra.mxu0 0
        %532 = vmatpush.bf16.msra.mxu0 0
        %533 = vmatpush.bf16.msra.mxu0 0
        %534 = vmatpush.bf16.msra.mxu0 0
        %535 = vmatpush.bf16.msra.mxu0 0
        %536 = vmatpush.bf16.msra.mxu0 %v527
        %537 = vmatmul.bf16.gmra.mxu0 %v523
        %v538 = vpop.f32.mrf.mxu0
        %v539 = vadd.f32 0.0, %v538
        %v540 = vpop.f32.mrf.mxu0
        %541 = vdwg.mxu0
        %v542 = vrcp.pop %v518
        %v543 = vmul.f32 %v539, %v542
        %545 = vrot.lane.b32.xlu0 %v485, 120
        %v546 = vpop.permute.xlu0 %545
        %547 = vrot.lane.b32.xlu0 %v486, 88
        %v548 = vpop.permute.xlu0 %547
        %v550 = vsel %vm490, %v546, 0
        %v553 = vsel %vm490, %v548, 0
        %555 = vmatpush.bf16.xpose.msra.mxu0 0
        %556 = vmatpush.bf16.xpose.msra.mxu0 0
        %557 = vmatpush.bf16.xpose.msra.mxu0 0
        %558 = vmatpush.bf16.xpose.msra.mxu0 0
        %559 = vmatpush.bf16.xpose.msra.mxu0 0
        %560 = vmatpush.bf16.xpose.msra.mxu0 0
        %561 = vmatpush.bf16.xpose.msra.mxu0 0
        %562 = vmatpush.bf16.xpose.msra.mxu0 %v553
        %563 = vmatmul.bf16.gmra.mxu0 %v550
        %v564 = vpop.f32.mrf.mxu0
        %v565 = vadd.f32 0.0, %v564
        %v566 = vpop.f32.mrf.mxu0
        %567 = vdwg.mxu0
        %v568 = vsel %vm490, %v565, -inf
        %569 = vmax.xlane.f32.xlu0 %v568
        %v570 = vpop.xlane.xlu0 %569
        %v571 = vsub.f32 %v565, %v570
        %v572 = vmul.f32 %v571, 1.442695
        %v573 = vpow.pop %v572
        %v574 = vsel %vm490, %v573, 0.0
        %575 = vadd.xlane.f32.xlu0 %v574
        %v576 = vpop.xlane.xlu0 %575
        %v577 = vpack.c.bf16 %v573, %v573
        %578 = vrot.lane.b32.xlu0 %v486, 56
        %v579 = vpop.permute.xlu0 %578
        %v581 = vsel %vm490, %v577, 0
        %v584 = vsel %vm525, %v579, 0
        %586 = vmatpush.bf16.msra.mxu0 0
        %587 = vmatpush.bf16.msra.mxu0 0
        %588 = vmatpush.bf16.msra.mxu0 0
        %589 = vmatpush.bf16.msra.mxu0 0
        %590 = vmatpush.bf16.msra.mxu0 0
        %591 = vmatpush.bf16.msra.mxu0 0
        %592 = vmatpush.bf16.msra.mxu0 0
        %593 = vmatpush.bf16.msra.mxu0 %v584
        %594 = vmatmul.bf16.gmra.mxu0 %v581
        %v595 = vpop.f32.mrf.mxu0
        %v596 = vadd.f32 0.0, %v595
        %v597 = vpop.f32.mrf.mxu0
        %598 = vdwg.mxu0
        %v599 = vrcp.pop %v576
        %v600 = vmul.f32 %v596, %v599
        %601 = vrot.lane.b32.xlu0 %v485, 112
        %v602 = vpop.permute.xlu0 %601
        %603 = vrot.lane.b32.xlu0 %v486, 80
        %v604 = vpop.permute.xlu0 %603
        %v606 = vsel %vm490, %v602, 0
        %v609 = vsel %vm490, %v604, 0
        %611 = vmatpush.bf16.xpose.msra.mxu0 0
        %612 = vmatpush.bf16.xpose.msra.mxu0 0
        %613 = vmatpush.bf16.xpose.msra.mxu0 0
        %614 = vmatpush.bf16.xpose.msra.mxu0 0
        %615 = vmatpush.bf16.xpose.msra.mxu0 0
        %616 = vmatpush.bf16.xpose.msra.mxu0 0
        %617 = vmatpush.bf16.xpose.msra.mxu0 0
        %618 = vmatpush.bf16.xpose.msra.mxu0 %v609
        %619 = vmatmul.bf16.gmra.mxu0 %v606
        %v620 = vpop.f32.mrf.mxu0
        %v621 = vadd.f32 0.0, %v620
        %v622 = vpop.f32.mrf.mxu0
        %623 = vdwg.mxu0
        %v624 = vsel %vm490, %v621, -inf
        %625 = vmax.xlane.f32.xlu0 %v624
        %v626 = vpop.xlane.xlu0 %625
        %v627 = vsub.f32 %v621, %v626
        %v628 = vmul.f32 %v627, 1.442695
        %v629 = vpow.pop %v628
        %v630 = vsel %vm490, %v629, 0.0
        %631 = vadd.xlane.f32.xlu0 %v630
        %v632 = vpop.xlane.xlu0 %631
        %v633 = vpack.c.bf16 %v629, %v629
        %634 = vrot.lane.b32.xlu0 %v486, 48
        %v635 = vpop.permute.xlu0 %634
        %v637 = vsel %vm490, %v633, 0
        %v640 = vsel %vm525, %v635, 0
        %642 = vmatpush.bf16.msra.mxu0 0
        %643 = vmatpush.bf16.msra.mxu0 0
        %644 = vmatpush.bf16.msra.mxu0 0
        %645 = vmatpush.bf16.msra.mxu0 0
        %646 = vmatpush.bf16.msra.mxu0 0
        %647 = vmatpush.bf16.msra.mxu0 0
        %648 = vmatpush.bf16.msra.mxu0 0
        %649 = vmatpush.bf16.msra.mxu0 %v640
        %650 = vmatmul.bf16.gmra.mxu0 %v637
        %v651 = vpop.f32.mrf.mxu0
        %v652 = vadd.f32 0.0, %v651
        %v653 = vpop.f32.mrf.mxu0
        %654 = vdwg.mxu0
        %v655 = vrcp.pop %v632
        %v656 = vmul.f32 %v652, %v655
        %657 = vrot.lane.b32.xlu0 %v485, 104
        %v658 = vpop.permute.xlu0 %657
        %659 = vrot.lane.b32.xlu0 %v486, 72
        %v660 = vpop.permute.xlu0 %659
        %v662 = vsel %vm490, %v658, 0
        %v665 = vsel %vm490, %v660, 0
        %667 = vmatpush.bf16.xpose.msra.mxu0 0
        %668 = vmatpush.bf16.xpose.msra.mxu0 0
        %669 = vmatpush.bf16.xpose.msra.mxu0 0
        %670 = vmatpush.bf16.xpose.msra.mxu0 0
        %671 = vmatpush.bf16.xpose.msra.mxu0 0
        %672 = vmatpush.bf16.xpose.msra.mxu0 0
        %673 = vmatpush.bf16.xpose.msra.mxu0 0
        %674 = vmatpush.bf16.xpose.msra.mxu0 %v665
        %675 = vmatmul.bf16.gmra.mxu0 %v662
        %v676 = vpop.f32.mrf.mxu0
        %v677 = vadd.f32 0.0, %v676
        %v678 = vpop.f32.mrf.mxu0
        %679 = vdwg.mxu0
        %v680 = vsel %vm490, %v677, -inf
        %681 = vmax.xlane.f32.xlu0 %v680
        %v682 = vpop.xlane.xlu0 %681
        %v683 = vsub.f32 %v677, %v682
        %v684 = vmul.f32 %v683, 1.442695
        %v685 = vpow.pop %v684
        %v686 = vsel %vm490, %v685, 0.0
        %687 = vadd.xlane.f32.xlu0 %v686
        %v688 = vpop.xlane.xlu0 %687
        %v689 = vpack.c.bf16 %v685, %v685
        %690 = vrot.lane.b32.xlu0 %v486, 40
        %v691 = vpop.permute.xlu0 %690
        %v693 = vsel %vm490, %v689, 0
        %v696 = vsel %vm525, %v691, 0
        %698 = vmatpush.bf16.msra.mxu0 0
        %699 = vmatpush.bf16.msra.mxu0 0
        %700 = vmatpush.bf16.msra.mxu0 0
        %701 = vmatpush.bf16.msra.mxu0 0
        %702 = vmatpush.bf16.msra.mxu0 0
        %703 = vmatpush.bf16.msra.mxu0 0
        %704 = vmatpush.bf16.msra.mxu0 0
        %705 = vmatpush.bf16.msra.mxu0 %v696
        %706 = vmatmul.bf16.gmra.mxu0 %v693
        %v707 = vpop.f32.mrf.mxu0
        %v708 = vadd.f32 0.0, %v707
        %v709 = vpop.f32.mrf.mxu0
        %710 = vdwg.mxu0
        %v711 = vrcp.pop %v688
        %v712 = vmul.f32 %v708, %v711
        %714 = vrot.lane.b32.xlu0 %v600, 8
        %v715 = vpop.permute.xlu0 %714
        %718 = vrot.lane.b32.xlu0 %v656, 16
        %v719 = vpop.permute.xlu0 %718
        %722 = vrot.lane.b32.xlu0 %v712, 24
        %v723 = vpop.permute.xlu0 %722
        %v725 = vsel %vm490, %v543, %v715
        %vm726 = vcmask 130048
        %v727 = vsel %vm726, %v725, %v719
        %vm728 = vcmask 195584
        %v729 = vsel %vm728, %v727, %v723
        %v730 = vpack.c.bf16 %v729, %v729
        %v731 = vld [vmem:[%s4] sm:$0xf]
        %v732 = vld [vmem:[%s4 + $0x4] sm:$0xf]
        %v733 = vld [vmem:[%s4 + $0x8] sm:$0xf]
        %v734 = vld [vmem:[%s4 + $0xc] sm:$0xf]
        %v735 = vld [vmem:[%s5] sm:$0x1]
        %v737 = vperm.slane %v735, 0
        %v743 = vunpack.c.l.b16 %v731
        %v744 = vunpack.c.l.b16 %v732
        %v745 = vunpack.c.l.b16 %v733
        %v746 = vunpack.c.l.b16 %v734
        %v747 = vpack.c.b16 %v744, %v743
        %v748 = vpack.c.b16 %v746, %v745
        %v752 = vsel %vm413, %v730, 0
        %754 = vmatpush.bf16.msra.mxu0 0
        %755 = vmatpush.bf16.msra.mxu0 0
        %756 = vmatpush.bf16.msra.mxu0 0
        %757 = vmatpush.bf16.msra.mxu0 0
        %758 = vmatpush.bf16.msra.mxu0 0
        %759 = vmatpush.bf16.msra.mxu0 0
        %760 = vmatpush.bf16.msra.mxu0 %v748
        %761 = vmatpush.bf16.msra.mxu0 %v747
        %762 = vmatmul.bf16.gmra.mxu0 %v752
        %v763 = vpop.f32.mrf.mxu0
        %v764 = vadd.f32 %v737, %v763
        %v765 = vpop.f32.mrf.mxu0
        %766 = vdwg.mxu0
        %v767 = vadd.f32 %v410, %v764
        %v768 = vld [vmem:[%s6] sm:$0x1]
        %v769 = vld [vmem:[%s7] sm:$0x1]
        %v770 = vsel %vm413, %v767, 0.0
        %771 = vadd.xlane.f32.xlu0 %v770
        %v772 = vpop.xlane.xlu0 %771
        %v773 = vmul.f32 %v772, %v423
        %v774 = vsub.f32 %v767, %v773
        %v775 = vmul.f32 %v774, %v774
        %v776 = vsel %vm413, %v775, 0.0
        %777 = vadd.xlane.f32.xlu0 %v776
        %v778 = vpop.xlane.xlu0 %777
        %v779 = vmul.f32 %v778, %v423
        %v780 = vadd.f32 %v779, 1e-05
        %v781 = vrsqrt.pop %v780
        %v782 = vmul.f32 %v781, %v780
        %v783 = vmul.f32 %v782, %v781
        %v784 = vmul.f32 0.5, %v783
        %v785 = vsub.f32 1.5, %v784
        %v786 = vmul.f32 %v781, %v785
        %vm787 = vweird.f32 %v780
        %vm788 = vweird.f32 %v781
        %vm789 = vmor %vm787, %vm788
        %v790 = vsel %vm789, %v781, %v786
        %v791 = vmul.f32 %v774, %v790
        %v793 = vperm.slane %v768, 0
        %v795 = vmul.f32 %v791, %v793
        %v797 = vperm.slane %v769, 0
        %v799 = vadd.f32 %v795, %v797
        %v800 = vpack.c.bf16 %v799, %v799
        %v801 = vld [vmem:[%s8] sm:$0xf]
        %v802 = vld [vmem:[%s8 + $0x4] sm:$0xf]
        %v803 = vld [vmem:[%s8 + $0x8] sm:$0xf]
        %v804 = vld [vmem:[%s8 + $0xc] sm:$0xf]
        %v805 = vld [vmem:[%s9] sm:$0x1]
        %v807 = vperm.slane %v805, 0
        %v813 = vunpack.c.l.b16 %v801
        %v814 = vunpack.c.l.b16 %v802
        %v815 = vunpack.c.l.b16 %v803
        %v816 = vunpack.c.l.b16 %v804
        %v817 = vpack.c.b16 %v814, %v813
        %v818 = vpack.c.b16 %v816, %v815
        %v822 = vsel %vm413, %v800, 0
        %824 = vmatpush.bf16.msra.mxu0 0
        %825 = vmatpush.bf16.msra.mxu0 0
        %826 = vmatpush.bf16.msra.mxu0 0
        %827 = vmatpush.bf16.msra.mxu0 0
        %828 = vmatpush.bf16.msra.mxu0 0
        %829 = vmatpush.bf16.msra.mxu0 0
        %830 = vmatpush.bf16.msra.mxu0 %v818
        %831 = vmatpush.bf16.msra.mxu0 %v817
        %832 = vmatmul.bf16.gmra.mxu0 %v822
        %v833 = vpop.f32.mrf.mxu0
        %v834 = vadd.f32 %v807, %v833
        %v835 = vpop.f32.mrf.mxu0
        %836 = vdwg.mxu0
        %v837 = vmul.f32 %v834, 0.5
        %v838 = vmul.f32 %v834, 0.70710677
        %v839 = vmul.f32 %v838, %v838
        %v840 = vmin.f32 16.0, %v839
        %v841 = vmul.f32 %v840, 2.1237322e-06
        %v842 = vadd.f32 %v841, 0.00028619796
        %v843 = vmul.f32 %v840, %v842
        %v844 = vadd.f32 %v843, 0.0036580483
        %v845 = vmul.f32 %v840, %v844
        %v846 = vadd.f32 %v845, 0.05243302
        %v847 = vmul.f32 %v840, %v846
        %v848 = vadd.f32 %v847, 0.18741608
        %v849 = vmul.f32 %v840, %v848
        %v850 = vadd.f32 %v849, 1.1283791
        %v851 = vmul.f32 %v838, %v850
        %v852 = vmul.f32 %v840, 3.8918573e-05
        %v853 = vadd.f32 %v852, 0.001143296
        %v854 = vmul.f32 %v840, %v853
        %v855 = vadd.f32 %v854, 0.014752088
        %v856 = vmul.f32 %v840, %v855
        %v857 = vadd.f32 %v856, 0.112945676
        %v858 = vmul.f32 %v840, %v857
        %v859 = vadd.f32 %v858, 0.4994258
        %v860 = vmul.f32 %v840, %v859
        %v861 = vadd.f32 %v860, 1.0
        %v862 = vrcp.pop %v861
        %v863 = vmul.f32 %v861, %v862
        %v864 = vsub.f32 1.0, %v863
        %v865 = vmul.f32 %v862, %v864
        %v866 = vadd.f32 %v862, %v865
        %vm867 = vweird.f32 %v861
        %vm868 = vweird.f32 %v862
        %vm869 = vmor %vm867, %vm868
        %v870 = vsel %vm869, %v862, %v866
        %v871 = vand.u32 2147483647, %v861
        %vm872 = vcmp.eq.f32.partialorder %v871, 8.507059e+37
        %v873 = vand.u32 %v861, 2147483648
        %v874 = vor.u32 1.1754944e-38, %v873
        %v875 = vsel %vm872, %v874, %v870
        %v876 = vmul.f32 %v851, %v875
        %v877 = vmin.f32 %v876, 1.0
        %v878 = vmax.f32 %v877, -1.0
        %v879 = vadd.f32 %v878, 1.0
        %v880 = vmul.f32 %v837, %v879
        %v881 = vpack.c.bf16 %v880, %v880
        %v882 = vld [vmem:[%s10] sm:$0xf]
        %v883 = vld [vmem:[%s10 + $0x4] sm:$0xf]
        %v884 = vld [vmem:[%s10 + $0x8] sm:$0xf]
        %v885 = vld [vmem:[%s10 + $0xc] sm:$0xf]
        %v886 = vld [vmem:[%s10 + $0x10] sm:$0xf]
        %v887 = vld [vmem:[%s10 + $0x14] sm:$0xf]
        %v888 = vld [vmem:[%s10 + $0x18] sm:$0xf]
        %v889 = vld [vmem:[%s10 + $0x1c] sm:$0xf]
        %v890 = vld [vmem:[%s10 + $0x20] sm:$0xf]
        %v891 = vld [vmem:[%s10 + $0x24] sm:$0xf]
        %v892 = vld [vmem:[%s10 + $0x28] sm:$0xf]
        %v893 = vld [vmem:[%s10 + $0x2c] sm:$0xf]
        %v894 = vld [vmem:[%s10 + $0x30] sm:$0xf]
        %v895 = vld [vmem:[%s10 + $0x34] sm:$0xf]
        %v896 = vld [vmem:[%s10 + $0x38] sm:$0xf]
        %v897 = vld [vmem:[%s10 + $0x3c] sm:$0xf]
        %v898 = vld [vmem:[%s11] sm:$0x1]
        %v900 = vperm.slane %v898, 0
        %v918 = vunpack.c.l.b16 %v882
        %v919 = vunpack.c.l.b16 %v883
        %v920 = vunpack.c.l.b16 %v884
        %v921 = vunpack.c.l.b16 %v885
        %v922 = vunpack.c.l.b16 %v886
        %v923 = vunpack.c.l.b16 %v887
        %v924 = vunpack.c.l.b16 %v888
        %v925 = vunpack.c.l.b16 %v889
        %v926 = vunpack.c.l.b16 %v890
        %v927 = vunpack.c.l.b16 %v891
        %v928 = vunpack.c.l.b16 %v892
        %v929 = vunpack.c.l.b16 %v893
        %v930 = vunpack.c.l.b16 %v894
        %v931 = vunpack.c.l.b16 %v895
        %v932 = vunpack.c.l.b16 %v896
        %v933 = vunpack.c.l.b16 %v897
        %v934 = vpack.c.b16 %v919, %v918
        %v935 = vpack.c.b16 %v921, %v920
        %v936 = vpack.c.b16 %v923, %v922
        %v937 = vpack.c.b16 %v925, %v924
        %v938 = vpack.c.b16 %v927, %v926
        %v939 = vpack.c.b16 %v929, %v928
        %v940 = vpack.c.b16 %v931, %v930
        %v941 = vpack.c.b16 %v933, %v932
        %950 = vmatpush.bf16.msra.mxu0 %v941
        %951 = vmatpush.bf16.msra.mxu0 %v940
        %952 = vmatpush.bf16.msra.mxu0 %v939
        %953 = vmatpush.bf16.msra.mxu0 %v938
        %954 = vmatpush.bf16.msra.mxu0 %v937
        %955 = vmatpush.bf16.msra.mxu0 %v936
        %956 = vmatpush.bf16.msra.mxu0 %v935
        %957 = vmatpush.bf16.msra.mxu0 %v934
        %958 = vmatmul.bf16.gmra.mxu0 %v881
        %v959 = vpop.f32.mrf.mxu0
        %v960 = vadd.f32 %v900, %v959
        %v961 = vpop.f32.mrf.mxu0
        %962 = vdwg.mxu0
        %v963 = vadd.f32 %v767, %v960
        %964 = vst.msk [vmem:[%s404] sm:$0xff] %vm413, %v963
        %s965 = sand.u32 %s291, 1
        %s966 = scalar_lea.sflag [#allocation3], %s965
        %s967 = sand.u32 %s291, 1
        %s968 = smul.addr %s967, 8
        %s969 = scalar_lea.vmem [#allocation2], %s968
        // Predicated region
        $region69: #{tpu_custom_call.1} parent=67 // pred_check
          %p970 = pneg %p301
        $region70: #{tpu_custom_call.1} parent=67 // pred_check_branch
          %972 = sbr.rel (%p970) target = $region72
        $region71: #{tpu_custom_call.1} parent=67 // pred_region
          %974 = vsyncadd %s966, 0
          %s975 = smul.addr %s26, 8
          %s976 = scalar_lea.hbm %s12, %s975
          %s978 = sshll.u32 %s969, 4
          %s979 = int_to_ptr.vmem [resolvable:$true] %s978
          %s980 = sshll.u32 %s976, 4
          %s981 = int_to_ptr.hbm [resolvable:$true] %s980
          %983 = dma.vmem_to_hbm [thread:$0]  %s979, 128, %s981, %s966
        $region72: #{tpu_custom_call.1} parent=67 // pred_fallthru
          _
      $region68: #{tpu_custom_call.1} parent=5 // pred_fallthru
        _
      %p984 = scmp.le.s32.totalorder 2, %s21
      // Predicated region
      $region73: #{tpu_custom_call.1} parent=5 // pred_check
        %p985 = pneg %p984
      $region74: #{tpu_custom_call.1} parent=5 // pred_check_branch
        %987 = sbr.rel (%p985) target = $region76
      $region75: #{tpu_custom_call.1} parent=5 // pred_region
        %s988 = ssub.s32 %s21, 2
        // Predicated region
        $region77: #{tpu_custom_call.1} parent=75 // pred_check
          %p989 = pneg %p307
        $region78: #{tpu_custom_call.1} parent=75 // pred_check_branch
          %991 = sbr.rel (%p989) target = $region80
        $region79: #{tpu_custom_call.1} parent=75 // pred_region
          %s992 = sand.u32 %s292, 1
          %s993 = scalar_lea.sflag [#allocation3], %s992
          %s994 = sand.u32 %s292, 1
          %s995 = smul.addr %s994, 8
          %s996 = scalar_lea.vmem [#allocation2], %s995
          %998 = dma.done %s993, 128
        $region80: #{tpu_custom_call.1} parent=75 // pred_fallthru
          _
      $region76: #{tpu_custom_call.1} parent=5 // pred_fallthru
        _
    $region6: #{tpu_custom_call.1} parent=1 // loop_footer
      %s25 = sadd.s32 1, %s21
    $region7: #{tpu_custom_call.1} parent=1 // loop_footer_branch
      %20 = sbr.rel target = $region3
    $region8: #{tpu_custom_call.1} parent=1 // loop_exit
      _
    %999 = vsyncpa [#allocation3], 1
    %s1000 = scalar_lea.sflag [#allocation3], 1
    %1001 = vsyncpa %s1000, 1

</llo_original>
